<compile_context>
chip_gen: v7x
topology: tpu7x:2x2x1
jax: 0.10.0
libtpu: 0.0.40
codegen_flags: <defaults>
</compile_context>

<pallas_src>
import jax
import jax.numpy as jnp
from jax.experimental import pallas as pl
from jax.experimental.pallas import tpu as pltpu

BN_EPS = 1e-5
GUMBEL_EPS = 1e-20

H1, H2 = 500, 200          # logical per-branch widths (PyTorch)
H1P, H2P = 512, 256        # 128-aligned padded per-branch widths
H1F, H2F = 2 * H1P, 2 * H2P   # fused widths: 1024, 512
OUT_W = 128                # lane-dense head/output width
K_ALIGN = 128              # layer-1 contraction padding (use 256 on v6e/v7x if desired)

# ---- packed small-parameter slab layout (f32, shape (1, SLAB_W)) ----
# every block starts at a 128-lane multiple and has a 128-multiple width.
G1_OFF = 0                     # gamma layer-1 (fused, 1024)
BE1_OFF = H1F                  # beta  layer-1 (fused, 1024)
G2_OFF = 2 * H1F               # gamma layer-2 (fused, 512)
BE2_OFF = 2 * H1F + H2F        # beta  layer-2 (fused, 512)
B3_OFF = 2 * H1F + 2 * H2F     # head bias lane-slab (128): lane0=b3l, lane1=b3i0-b3i1
SLAB_W = B3_OFF + OUT_W        # 3200


def _round_up(n, m):
    return ((n + m - 1) // m) * m


def _bn_relu(h, gamma, beta):
    """Training-mode BatchNorm1d (batch stats, biased var) + ReLU, in f32.
    Padded (all-zero) columns come out as beta (=0) and stay zero after ReLU."""
    mean = jnp.mean(h, axis=0, keepdims=True)
    var = jnp.mean(jnp.square(h - mean), axis=0, keepdims=True)
    h = (h - mean) * jax.lax.rsqrt(var + BN_EPS) * gamma + beta
    return jnp.maximum(h, 0.0)


def _model_kernel(x_ref, gum_ref, temp_ref, w1_ref, w2_ref, w3_ref, slab_ref,
                  out_ref):
    # ---- layer 1: both branches fused along the (padded) output dim ----
    xb = x_ref[...].astype(jnp.bfloat16)                               # (B, in_pad)
    h1 = jnp.dot(xb, w1_ref[...], preferred_element_type=jnp.float32)  # (B, 1024)
    # pre-BN biases dropped (cancelled by train-mode BN); per-column stats make
    # the fused BN over 1024 columns exact per branch.
    h1 = _bn_relu(h1,
                  slab_ref[:, G1_OFF:G1_OFF + H1F],
                  slab_ref[:, BE1_OFF:BE1_OFF + H1F])

    # ---- layer 2: block-diagonal weight keeps branches in aligned col blocks ----
    h2 = jnp.dot(h1.astype(jnp.bfloat16), w2_ref[...],
                 preferred_element_type=jnp.float32)                   # (B, 512)
    h2 = _bn_relu(h2,
                  slab_ref[:, G2_OFF:G2_OFF + H2F],
                  slab_ref[:, BE2_OFF:BE2_OFF + H2F])

    # ---- heads: one lane-dense (512,128) matmul ----
    #   lane 0 = LabelDisc output (ylogit), lane 1 = InforDisc logit diff z0-z1
    head = jnp.dot(h2.astype(jnp.bfloat16), w3_ref[...],
                   preferred_element_type=jnp.float32)                 # (B, 128)
    head = head + slab_ref[:, B3_OFF:B3_OFF + OUT_W]

    # ---- closed-form 2-class Gumbel-softmax(hard=True) epilogue ----
    # log_softmax preserves logit differences, and max of a 2-class softmax is
    # sigmoid(|y0 - y1|)  =>  zsample = sigmoid(|(z0-z1) + (g0-g1)| / temp).
    # gum_ref carries (g0-g1) in lane 1 and zeros elsewhere.
    inv_t = 1.0 / temp_ref[0, 0]
    y = (head + gum_ref[...]) * inv_t
    s = 1.0 / (1.0 + jnp.exp(-jnp.abs(y)))        # exact sigmoid, all lanes

    lane = jax.lax.broadcasted_iota(jnp.int32, out_ref.shape, 1)
    out_ref[...] = jnp.where(lane == 0, head,     # lane 0: ylogit
                             jnp.where(lane == 1, s, 0.0))  # lane 1: zsample


def _vmem_limit_bytes(B, in_pad):
    w_bytes = (in_pad * H1F + H1F * H2F + H2F * OUT_W) * 2      # bf16 weights
    io_bytes = B * (in_pad + 2 * OUT_W) * 4 + SLAB_W * 4        # x, gum, out, slab
    act_bytes = B * (H1F + H2F + OUT_W) * 4 * 2                 # intermediates (headroom)
    limit = 2 * (w_bytes + io_bytes) + act_bytes + (4 << 20)    # buffers + margin
    return int(min(max(limit, 16 << 20), 64 << 20))             # valid on v5e..v7x


def my_model_forward(x, gumbel_noise, packed, temp):
    """packed = (w1 bf16 (in_pad,1024), w2 bf16 (1024,512), w3 bf16 (512,128),
                 slab f32 (1, SLAB_W)).  Returns (ylogit (B,1), zsample (B,))."""
    B, in_size = x.shape
    w1, w2, w3, slab = packed
    in_pad = w1.shape[0]

    # lane-dense, zero-padded inputs (padding rows/lanes are exact no-ops)
    xp = jnp.zeros((B, in_pad), jnp.float32).at[:, :in_size].set(x)
    gpad = jnp.zeros((B, OUT_W), jnp.float32).at[:, 1].set(
        gumbel_noise[:, 0] - gumbel_noise[:, 1])
    temp_arr = jnp.asarray(temp, jnp.float32).reshape(1, 1)

    vmem = pl.BlockSpec(memory_space=pltpu.MemorySpace.VMEM)
    smem = pl.BlockSpec(memory_space=pltpu.MemorySpace.SMEM)

    out = pl.pallas_call(
        _model_kernel,
        out_shape=jax.ShapeDtypeStruct((B, OUT_W), jnp.float32),
        in_specs=[vmem, vmem, smem, vmem, vmem, vmem, vmem],
        out_specs=vmem,
        compiler_params=pltpu.CompilerParams(
            vmem_limit_bytes=_vmem_limit_bytes(B, in_pad)),
    )(xp, gpad, temp_arr, w1, w2, w3, slab)
    return out[:, 0:1], out[:, 1]


# ---------------- parameter construction & packing ----------------

def _linear_init(key, fan_in, fan_out):
    """PyTorch-style Linear init; weight returned transposed as (in, out)."""
    kw, kb = jax.random.split(key)
    bound = 1.0 / jnp.sqrt(fan_in)
    w = jax.random.uniform(kw, (fan_in, fan_out), jnp.float32, -bound, bound)
    b = jax.random.uniform(kb, (fan_out,), jnp.float32, -bound, bound)
    return w, b


def _bn_init(dim):
    return jnp.ones((dim,), jnp.float32), jnp.zeros((dim,), jnp.float32)


def init_params(key, in_size):
    """Raw PyTorch-layout parameters (20 arrays)."""
    keys = jax.random.split(key, 6)
    w1i, b1i = _linear_init(keys[0], in_size, H1)
    g1i, be1i = _bn_init(H1)
    w2i, b2i = _linear_init(keys[1], H1, H2)
    g2i, be2i = _bn_init(H2)
    w3i, b3i = _linear_init(keys[2], H2, 2)
    w1l, b1l = _linear_init(keys[3], in_size, H1)
    g1l, be1l = _bn_init(H1)
    w2l, b2l = _linear_init(keys[4], H1, H2)
    g2l, be2l = _bn_init(H2)
    w3l, b3l = _linear_init(keys[5], H2, 1)
    return (w1i, b1i, g1i, be1i, w2i, b2i, g2i, be2i, w3i, b3i,
            w1l, b1l, g1l, be1l, w2l, b2l, g2l, be2l, w3l, b3l)


def pack_params(raw, in_size):
    """One-time packing: 128-aligned, zero-padded, block-diagonal bf16 weights
    and one f32 slab for the small per-feature params.
    Pre-BN linear biases are intentionally dropped (exact in train-mode BN)."""
    (w1i, _b1i, g1i, be1i, w2i, _b2i, g2i, be2i, w3i, b3i,
     w1l, _b1l, g1l, be1l, w2l, _b2l, g2l, be2l, w3l, b3l) = raw
    in_pad = _round_up(in_size, K_ALIGN)

    # layer 1: branches side by side in 512-wide column blocks, K zero-padded
    w1 = jnp.zeros((in_pad, H1F), jnp.float32)
    w1 = w1.at[:in_size, 0:H1].set(w1i)
    w1 = w1.at[:in_size, H1P:H1P + H1].set(w1l)

    # layer 2: block-diagonal (no cross-branch mixing, no batch restack needed)
    w2 = jnp.zeros((H1F, H2F), jnp.float32)
    w2 = w2.at[0:H1, 0:H2].set(w2i)
    w2 = w2.at[H1P:H1P + H1, H2P:H2P + H2].set(w2l)

    # heads: lane 0 = LabelDisc output, lane 1 = InforDisc logit diff (z0 - z1)
    w3 = jnp.zeros((H2F, OUT_W), jnp.float32)
    w3 = w3.at[H2P:H2P + H2, 0].set(w3l[:, 0])
    w3 = w3.at[0:H2, 1].set(w3i[:, 0] - w3i[:, 1])

    slab = jnp.zeros((1, SLAB_W), jnp.float32)
    slab = slab.at[0, G1_OFF:G1_OFF + H1].set(g1i)
    slab = slab.at[0, G1_OFF + H1P:G1_OFF + H1P + H1].set(g1l)
    slab = slab.at[0, BE1_OFF:BE1_OFF + H1].set(be1i)
    slab = slab.at[0, BE1_OFF + H1P:BE1_OFF + H1P + H1].set(be1l)
    slab = slab.at[0, G2_OFF:G2_OFF + H2].set(g2i)
    slab = slab.at[0, G2_OFF + H2P:G2_OFF + H2P + H2].set(g2l)
    slab = slab.at[0, BE2_OFF:BE2_OFF + H2].set(be2i)
    slab = slab.at[0, BE2_OFF + H2P:BE2_OFF + H2P + H2].set(be2l)
    slab = slab.at[0, B3_OFF + 0].set(b3l[0])
    slab = slab.at[0, B3_OFF + 1].set(b3i[0] - b3i[1])

    return (w1.astype(jnp.bfloat16), w2.astype(jnp.bfloat16),
            w3.astype(jnp.bfloat16), slab)


def sample_gumbel(key, shape, eps=GUMBEL_EPS):
    u = jax.random.uniform(key, shape, jnp.float32)
    return -jnp.log(-jnp.log(u + eps) + eps)


# ---------------- pure-JAX reference (matches kernel's bf16 dot numerics) ----

def _ref_dot(h, w):
    return jnp.dot(h.astype(jnp.bfloat16), w.astype(jnp.bfloat16),
                   preferred_element_type=jnp.float32)


def _ref_block(h, w, b, g, be):
    h = _ref_dot(h, w) + b
    mean = jnp.mean(h, axis=0, keepdims=True)
    var = jnp.mean(jnp.square(h - mean), axis=0, keepdims=True)
    h = (h - mean) * jax.lax.rsqrt(var + BN_EPS) * g + be
    return jnp.maximum(h, 0.0)


def reference_forward(x, gnoise, raw, temp):
    (w1i, b1i, g1i, be1i, w2i, b2i, g2i, be2i, w3i, b3i,
     w1l, b1l, g1l, be1l, w2l, b2l, g2l, be2l, w3l, b3l) = raw
    hi = _ref_block(x, w1i, b1i, g1i, be1i)
    hi = _ref_block(hi, w2i, b2i, g2i, be2i)
    zlog = jax.nn.log_softmax(_ref_dot(hi, w3i) + b3i, axis=-1)
    hl = _ref_block(x, w1l, b1l, g1l, be1l)
    hl = _ref_block(hl, w2l, b2l, g2l, be2l)
    ylogit = _ref_dot(hl, w3l) + b3l
    p = jax.nn.softmax((zlog + gnoise) / temp, axis=-1)
    return ylogit, jnp.max(p, axis=-1)


if __name__ == "__main__":
    B, IN_SIZE, TEMP = 8, 32, 0.5

    root = jax.random.PRNGKey(0)
    k_x, k_params, k_gumbel = jax.random.split(root, 3)

    x = jax.random.normal(k_x, (B, IN_SIZE), jnp.float32)
    raw_params = init_params(k_params, IN_SIZE)
    packed = pack_params(raw_params, IN_SIZE)
    gnoise = sample_gumbel(k_gumbel, (B, 2))

    ylogit, zsample = my_model_forward(x, gnoise, packed, TEMP)
    jax.block_until_ready((ylogit, zsample))

    assert ylogit.shape == (B, 1) and zsample.shape == (B,)
    assert bool(jnp.all(jnp.isfinite(ylogit))) and bool(jnp.all(jnp.isfinite(zsample)))
    # max of a 2-class softmax lies in [0.5, 1]
    assert bool(jnp.all(zsample >= 0.5 - 1e-3)) and bool(jnp.all(zsample <= 1.0 + 1e-3))

    # compare against a pure-JAX reference using the same bf16 matmul numerics
    ref_y, ref_z = reference_forward(x, gnoise, raw_params, TEMP)
    assert bool(jnp.allclose(ylogit, ref_y, atol=5e-3, rtol=0.0)), "ylogit mismatch"
    assert bool(jnp.allclose(zsample, ref_z, atol=1e-2, rtol=0.0)), "zsample mismatch"

    print("KERNEL_OK")
</pallas_src>

<mosaic_0001>
module attributes {stable_mosaic.version = 11 : i64} {
  func.func @_model_kernel(%arg0: memref<8x128xf32, #tpu.memory_space<vmem>>, %arg1: memref<8x128xf32, #tpu.memory_space<vmem>>, %arg2: memref<1x1xf32, #tpu.memory_space<smem>>, %arg3: memref<128x1024xbf16, #tpu.memory_space<vmem>>, %arg4: memref<1024x512xbf16, #tpu.memory_space<vmem>>, %arg5: memref<512x128xbf16, #tpu.memory_space<vmem>>, %arg6: memref<1x3200xf32, #tpu.memory_space<vmem>>, %arg7: memref<8x128xf32, #tpu.memory_space<vmem>>) attributes {dimension_semantics = [], scalar_prefetch = 0 : i64, scratch_operands = 0 : i64, tpu.core_type = #tpu.core_type<tc>} {
    %c0 = arith.constant 0 : index
    %c0_0 = arith.constant 0 : index
    %0 = vector.load %arg0[%c0, %c0_0] : memref<8x128xf32, #tpu.memory_space<vmem>>, vector<8x128xf32>
    %1 = arith.truncf %0 : vector<8x128xf32> to vector<8x128xbf16>
    %c0_1 = arith.constant 0 : index
    %c0_2 = arith.constant 0 : index
    %2 = vector.load %arg3[%c0_1, %c0_2] : memref<128x1024xbf16, #tpu.memory_space<vmem>>, vector<128x1024xbf16>
    %cst = arith.constant dense<0.000000e+00> : vector<8x1024xf32>
    %3 = tpu.matmul %1, %2, %cst {dimension_numbers = #tpu.dot_dimension_numbers<[1], [0], [0], [1], [0, 0, 1, 1], [], []>} : vector<8x128xbf16>, vector<128x1024xbf16>, vector<8x1024xf32> -> vector<8x1024xf32>
    %c0_3 = arith.constant 0 : index
    %c0_4 = arith.constant 0 : index
    %4 = vector.load %arg6[%c0_3, %c0_4] : memref<1x3200xf32, #tpu.memory_space<vmem>>, vector<1x1024xf32>
    %c0_5 = arith.constant 0 : index
    %c1024 = arith.constant 1024 : index
    %5 = vector.load %arg6[%c0_5, %c1024] : memref<1x3200xf32, #tpu.memory_space<vmem>>, vector<1x1024xf32>
    %cst_6 = arith.constant dense<0.000000e+00> : vector<1024xf32>
    %6 = vector.multi_reduction <add>, %3, %cst_6 [0] : vector<8x1024xf32> to vector<1024xf32>
    %7 = vector.shape_cast %6 : vector<1024xf32> to vector<1x1024xf32>
    %cst_7 = arith.constant 8.000000e+00 : f32
    %8 = vector.broadcast %cst_7 : f32 to vector<1x1024xf32>
    %9 = arith.divf %7, %8 : vector<1x1024xf32>
    %10 = vector.broadcast %9 : vector<1x1024xf32> to vector<8x1024xf32>
    %11 = arith.subf %3, %10 : vector<8x1024xf32>
    %12 = arith.mulf %11, %11 : vector<8x1024xf32>
    %cst_8 = arith.constant dense<0.000000e+00> : vector<1024xf32>
    %13 = vector.multi_reduction <add>, %12, %cst_8 [0] : vector<8x1024xf32> to vector<1024xf32>
    %14 = vector.shape_cast %13 : vector<1024xf32> to vector<1x1024xf32>
    %cst_9 = arith.constant 8.000000e+00 : f32
    %15 = vector.broadcast %cst_9 : f32 to vector<1x1024xf32>
    %16 = arith.divf %14, %15 : vector<1x1024xf32>
    %17 = vector.broadcast %9 : vector<1x1024xf32> to vector<8x1024xf32>
    %18 = arith.subf %3, %17 : vector<8x1024xf32>
    %cst_10 = arith.constant 9.99999974E-6 : f32
    %19 = vector.broadcast %cst_10 : f32 to vector<1x1024xf32>
    %20 = arith.addf %16, %19 : vector<1x1024xf32>
    %21 = math.rsqrt %20 : vector<1x1024xf32>
    %22 = vector.broadcast %21 : vector<1x1024xf32> to vector<8x1024xf32>
    %23 = arith.mulf %18, %22 : vector<8x1024xf32>
    %24 = vector.broadcast %4 : vector<1x1024xf32> to vector<8x1024xf32>
    %25 = arith.mulf %23, %24 : vector<8x1024xf32>
    %26 = vector.broadcast %5 : vector<1x1024xf32> to vector<8x1024xf32>
    %27 = arith.addf %25, %26 : vector<8x1024xf32>
    %cst_11 = arith.constant 0.000000e+00 : f32
    %28 = vector.broadcast %cst_11 : f32 to vector<8x1024xf32>
    %29 = arith.maximumf %27, %28 : vector<8x1024xf32>
    %30 = arith.truncf %29 : vector<8x1024xf32> to vector<8x1024xbf16>
    %c0_12 = arith.constant 0 : index
    %c0_13 = arith.constant 0 : index
    %31 = vector.load %arg4[%c0_12, %c0_13] : memref<1024x512xbf16, #tpu.memory_space<vmem>>, vector<1024x512xbf16>
    %cst_14 = arith.constant dense<0.000000e+00> : vector<8x512xf32>
    %32 = tpu.matmul %30, %31, %cst_14 {dimension_numbers = #tpu.dot_dimension_numbers<[1], [0], [0], [1], [0, 0, 1, 1], [], []>} : vector<8x1024xbf16>, vector<1024x512xbf16>, vector<8x512xf32> -> vector<8x512xf32>
    %c0_15 = arith.constant 0 : index
    %c2048 = arith.constant 2048 : index
    %33 = vector.load %arg6[%c0_15, %c2048] : memref<1x3200xf32, #tpu.memory_space<vmem>>, vector<1x512xf32>
    %c0_16 = arith.constant 0 : index
    %c2560 = arith.constant 2560 : index
    %34 = vector.load %arg6[%c0_16, %c2560] : memref<1x3200xf32, #tpu.memory_space<vmem>>, vector<1x512xf32>
    %cst_17 = arith.constant dense<0.000000e+00> : vector<512xf32>
    %35 = vector.multi_reduction <add>, %32, %cst_17 [0] : vector<8x512xf32> to vector<512xf32>
    %36 = vector.shape_cast %35 : vector<512xf32> to vector<1x512xf32>
    %cst_18 = arith.constant 8.000000e+00 : f32
    %37 = vector.broadcast %cst_18 : f32 to vector<1x512xf32>
    %38 = arith.divf %36, %37 : vector<1x512xf32>
    %39 = vector.broadcast %38 : vector<1x512xf32> to vector<8x512xf32>
    %40 = arith.subf %32, %39 : vector<8x512xf32>
    %41 = arith.mulf %40, %40 : vector<8x512xf32>
    %cst_19 = arith.constant dense<0.000000e+00> : vector<512xf32>
    %42 = vector.multi_reduction <add>, %41, %cst_19 [0] : vector<8x512xf32> to vector<512xf32>
    %43 = vector.shape_cast %42 : vector<512xf32> to vector<1x512xf32>
    %cst_20 = arith.constant 8.000000e+00 : f32
    %44 = vector.broadcast %cst_20 : f32 to vector<1x512xf32>
    %45 = arith.divf %43, %44 : vector<1x512xf32>
    %46 = vector.broadcast %38 : vector<1x512xf32> to vector<8x512xf32>
    %47 = arith.subf %32, %46 : vector<8x512xf32>
    %cst_21 = arith.constant 9.99999974E-6 : f32
    %48 = vector.broadcast %cst_21 : f32 to vector<1x512xf32>
    %49 = arith.addf %45, %48 : vector<1x512xf32>
    %50 = math.rsqrt %49 : vector<1x512xf32>
    %51 = vector.broadcast %50 : vector<1x512xf32> to vector<8x512xf32>
    %52 = arith.mulf %47, %51 : vector<8x512xf32>
    %53 = vector.broadcast %33 : vector<1x512xf32> to vector<8x512xf32>
    %54 = arith.mulf %52, %53 : vector<8x512xf32>
    %55 = vector.broadcast %34 : vector<1x512xf32> to vector<8x512xf32>
    %56 = arith.addf %54, %55 : vector<8x512xf32>
    %cst_22 = arith.constant 0.000000e+00 : f32
    %57 = vector.broadcast %cst_22 : f32 to vector<8x512xf32>
    %58 = arith.maximumf %56, %57 : vector<8x512xf32>
    %59 = arith.truncf %58 : vector<8x512xf32> to vector<8x512xbf16>
    %c0_23 = arith.constant 0 : index
    %c0_24 = arith.constant 0 : index
    %60 = vector.load %arg5[%c0_23, %c0_24] : memref<512x128xbf16, #tpu.memory_space<vmem>>, vector<512x128xbf16>
    %cst_25 = arith.constant dense<0.000000e+00> : vector<8x128xf32>
    %61 = tpu.matmul %59, %60, %cst_25 {dimension_numbers = #tpu.dot_dimension_numbers<[1], [0], [0], [1], [0, 0, 1, 1], [], []>} : vector<8x512xbf16>, vector<512x128xbf16>, vector<8x128xf32> -> vector<8x128xf32>
    %c0_26 = arith.constant 0 : index
    %c3072 = arith.constant 3072 : index
    %62 = vector.load %arg6[%c0_26, %c3072] : memref<1x3200xf32, #tpu.memory_space<vmem>>, vector<1x128xf32>
    %63 = vector.broadcast %62 : vector<1x128xf32> to vector<8x128xf32>
    %64 = arith.addf %61, %63 : vector<8x128xf32>
    %c0_27 = arith.constant 0 : index
    %c0_28 = arith.constant 0 : index
    %65 = memref.load %arg2[%c0_27, %c0_28] : memref<1x1xf32, #tpu.memory_space<smem>>
    %cst_29 = arith.constant 1.000000e+00 : f32
    %66 = arith.divf %cst_29, %65 : f32
    %c0_30 = arith.constant 0 : index
    %c0_31 = arith.constant 0 : index
    %67 = vector.load %arg1[%c0_30, %c0_31] : memref<8x128xf32, #tpu.memory_space<vmem>>, vector<8x128xf32>
    %68 = arith.addf %64, %67 : vector<8x128xf32>
    %69 = vector.broadcast %66 : f32 to vector<8x128xf32>
    %70 = arith.mulf %68, %69 : vector<8x128xf32>
    %71 = math.absf %70 : vector<8x128xf32>
    %cst_32 = arith.constant 0.000000e+00 : f32
    %72 = vector.broadcast %cst_32 : f32 to vector<8x128xf32>
    %73 = arith.subf %72, %71 : vector<8x128xf32>
    %74 = math.exp %73 : vector<8x128xf32>
    %cst_33 = arith.constant 1.000000e+00 : f32
    %75 = vector.broadcast %cst_33 : f32 to vector<8x128xf32>
    %76 = arith.addf %75, %74 : vector<8x128xf32>
    %cst_34 = arith.constant 1.000000e+00 : f32
    %77 = vector.broadcast %cst_34 : f32 to vector<8x128xf32>
    %78 = arith.divf %77, %76 : vector<8x128xf32>
    %79 = tpu.iota {dimensions = array<i32: 1>} : vector<8x128xi32>
    %c0_i32 = arith.constant 0 : i32
    %80 = vector.broadcast %c0_i32 : i32 to vector<8x128xi32>
    %81 = arith.cmpi eq, %79, %80 : vector<8x128xi32>
    %c1_i32 = arith.constant 1 : i32
    %82 = vector.broadcast %c1_i32 : i32 to vector<8x128xi32>
    %83 = arith.cmpi eq, %79, %82 : vector<8x128xi32>
    %cst_35 = arith.constant 0.000000e+00 : f32
    %84 = vector.broadcast %cst_35 : f32 to vector<8x128xf32>
    %85 = arith.select %83, %78, %84 : vector<8x128xi1>, vector<8x128xf32>
    %86 = arith.select %81, %64, %85 : vector<8x128xi1>, vector<8x128xf32>
    %c0_36 = arith.constant 0 : index
    %c0_37 = arith.constant 0 : index
    %87 = vector.load %arg7[%c0_36, %c0_37] : memref<8x128xf32, #tpu.memory_space<vmem>>, vector<8x128xf32>
    tpu.vector_store %arg7[%c0_36, %c0_37], %86 {strides = array<i32>} : memref<8x128xf32, #tpu.memory_space<vmem>>, vector<8x128xf32>,
    return
  }
}

</mosaic_0001>

<llo_original>
// kernel: tpu_custom_call.1
$region0: #{tpu_custom_call.1}
  #allocation0 [shape = 'u32[]', space=smem, size = 0x4, offset = 0x4, fixed_abs, tag = 'smem constant byte address 0x4 - core index']
  #allocation1 [shape = 'u32[144,128]{1,0:T(1,128)}', space=vmem, size = 0x12000, scoped, tag = 'internal scratch']
  #allocation2 [shape = 'f32[1,1]{1,0:T(1,128)S(6)}', space=smem, size = 0x200, scoped, tag = 'scoped memory for tpu_custom_call.1']
  %s0 = inlined_call_operand.hbm [shape: f32[8,128], index: 0, kind: input, shape index: {}]
  %s1 = inlined_call_operand.hbm [shape: f32[8,128], index: 1, kind: input, shape index: {}]
  %s2 = inlined_call_operand.<no memory space> [shape: f32[1,1], index: 2, kind: input, shape index: {}]
  %s3 = inlined_call_operand.hbm [shape: bf16[128,1024], index: 3, kind: input, shape index: {}]
  %s4 = inlined_call_operand.hbm [shape: bf16[1024,512], index: 4, kind: input, shape index: {}]
  %s5 = inlined_call_operand.hbm [shape: bf16[512,128], index: 5, kind: input, shape index: {}]
  %s6 = inlined_call_operand.hbm [shape: f32[1,3200], index: 6, kind: input, shape index: {}]
  %s7 = inlined_call_operand.hbm [shape: f32[8,128], index: 7, kind: output, shape index: {}]
  %s8 = sld [smem:[#allocation0]]
  $region62: #{tpu_custom_call.1} parent=0
    _
  %s10 = ssub.s32 1, %s8
  %s11 = scalar_select 0, %s10, %s8
  %12 = sst [smem:[#allocation2]] %s2
  $region1: #{tpu_custom_call.1} parent=0
    #allocation3 [shape = 'u8[4096]{0}', space=vmem, size = 0x1000, scoped, tag = 'input window, operand 0, single buffered']
    #allocation4 [shape = 's32[1]{0}', space=sflag, size = 0x4, scoped, tag = 'scoped memory for tpu_custom_call.1']
    #allocation5 [shape = 's32[1]{0}', space=sflag, size = 0x4, scoped, tag = 'scoped memory for tpu_custom_call.1']
    #allocation6 [shape = 'u8[4096]{0}', space=vmem, size = 0x1000, scoped, tag = 'input window, operand 1, single buffered']
    #allocation7 [shape = 's32[1]{0}', space=sflag, size = 0x4, scoped, tag = 'scoped memory for tpu_custom_call.1']
    #allocation8 [shape = 'u8[262144]{0}', space=vmem, size = 0x40000, scoped, tag = 'input window, operand 3, single buffered']
    #allocation9 [shape = 'u8[1048576]{0}', space=vmem, size = 0x100000, scoped, tag = 'input window, operand 4, single buffered']
    #allocation10 [shape = 's32[1]{0}', space=sflag, size = 0x4, scoped, tag = 'scoped memory for tpu_custom_call.1']
    #allocation11 [shape = 'u8[131072]{0}', space=vmem, size = 0x20000, scoped, tag = 'input window, operand 5, single buffered']
    #allocation12 [shape = 'u8[12800]{0}', space=vmem, size = 0x3400, scoped, tag = 'input window, operand 6, single buffered']
    #allocation13 [shape = 's32[1]{0}', space=sflag, size = 0x4, scoped, tag = 'scoped memory for tpu_custom_call.1']
    #allocation14 [shape = 'u8[4096]{0}', space=vmem, size = 0x1000, scoped, tag = 'output window, operand 0, single buffered']
    %13 = vsyncpa [#allocation4], 0
    %14 = vsyncpa [#allocation7], 0
    %15 = vsyncpa [#allocation10], 0
    %16 = vsyncpa [#allocation13], 0
    %17 = vsyncpa [#allocation5], 0
    // Predicated region
    $region2: #{tpu_custom_call.1} parent=1 // pred_check
      _
    $region3: #{tpu_custom_call.1} parent=1 // pred_check_branch
      %19 = sbr.rel (0) target = $region5
    $region4: #{tpu_custom_call.1} parent=1 // pred_region
      %s21 = ssub.s32 128, 128
      %22 = vsyncadd [#allocation4], %s21
      %s24 = sshll.u32 [#allocation3], 4
      %s25 = int_to_ptr.vmem [resolvable:$true] %s24
      %27 = dma.hbm_to_vmem [thread:$0]  %s0, 128, %s25, [#allocation4]
    $region5: #{tpu_custom_call.1} parent=1 // pred_fallthru
      _
    // Predicated region
    $region6: #{tpu_custom_call.1} parent=1 // pred_check
      _
    $region7: #{tpu_custom_call.1} parent=1 // pred_check_branch
      %29 = sbr.rel (0) target = $region9
    $region8: #{tpu_custom_call.1} parent=1 // pred_region
      %s31 = ssub.s32 128, 128
      %32 = vsyncadd [#allocation7], %s31
      %s34 = sshll.u32 [#allocation6], 4
      %s35 = int_to_ptr.vmem [resolvable:$true] %s34
      %37 = dma.hbm_to_vmem [thread:$0]  %s1, 128, %s35, [#allocation7]
    $region9: #{tpu_custom_call.1} parent=1 // pred_fallthru
      _
    // Predicated region
    $region10: #{tpu_custom_call.1} parent=1 // pred_check
      _
    $region11: #{tpu_custom_call.1} parent=1 // pred_check_branch
      %39 = sbr.rel (0) target = $region13
    $region12: #{tpu_custom_call.1} parent=1 // pred_region
      _
    $region13: #{tpu_custom_call.1} parent=1 // pred_fallthru
      _
    // Predicated region
    $region14: #{tpu_custom_call.1} parent=1 // pred_check
      _
    $region15: #{tpu_custom_call.1} parent=1 // pred_check_branch
      %41 = sbr.rel (0) target = $region17
    $region16: #{tpu_custom_call.1} parent=1 // pred_region
      %s43 = ssub.s32 8192, 8192
      %44 = vsyncadd [#allocation7], %s43
      %s45 = sshll.u32 [#allocation8], 4
      %s46 = int_to_ptr.vmem [resolvable:$true] %s45
      %51 = dma.hbm_to_vmem [thread:$0]  %s3, 8192, %s46, [#allocation7], 512, 512, 32
    $region17: #{tpu_custom_call.1} parent=1 // pred_fallthru
      _
    // Predicated region
    $region18: #{tpu_custom_call.1} parent=1 // pred_check
      _
    $region19: #{tpu_custom_call.1} parent=1 // pred_check_branch
      %53 = sbr.rel (0) target = $region21
    $region20: #{tpu_custom_call.1} parent=1 // pred_region
      %s55 = ssub.s32 32768, 32768
      %56 = vsyncadd [#allocation10], %s55
      %s57 = sshll.u32 [#allocation9], 4
      %s58 = int_to_ptr.vmem [resolvable:$true] %s57
      %63 = dma.hbm_to_vmem [thread:$0]  %s4, 32768, %s58, [#allocation10], 256, 256, 16
    $region21: #{tpu_custom_call.1} parent=1 // pred_fallthru
      _
    // Predicated region
    $region22: #{tpu_custom_call.1} parent=1 // pred_check
      _
    $region23: #{tpu_custom_call.1} parent=1 // pred_check_branch
      %65 = sbr.rel (0) target = $region25
    $region24: #{tpu_custom_call.1} parent=1 // pred_region
      %s67 = ssub.s32 4096, 4096
      %68 = vsyncadd [#allocation10], %s67
      %s69 = sshll.u32 [#allocation11], 4
      %s70 = int_to_ptr.vmem [resolvable:$true] %s69
      %75 = dma.hbm_to_vmem [thread:$0]  %s5, 4096, %s70, [#allocation10], 64, 64, 4
    $region25: #{tpu_custom_call.1} parent=1 // pred_fallthru
      _
    // Predicated region
    $region26: #{tpu_custom_call.1} parent=1 // pred_check
      _
    $region27: #{tpu_custom_call.1} parent=1 // pred_check_branch
      %77 = sbr.rel (0) target = $region29
    $region28: #{tpu_custom_call.1} parent=1 // pred_region
      %s79 = ssub.s32 400, 400
      %80 = vsyncadd [#allocation13], %s79
      %s82 = sshll.u32 [#allocation12], 4
      %s83 = int_to_ptr.vmem [resolvable:$true] %s82
      %85 = dma.hbm_to_vmem [thread:$0]  %s6, 400, %s83, [#allocation13]
    $region29: #{tpu_custom_call.1} parent=1 // pred_fallthru
      _
    // Predicated region
    $region30: #{tpu_custom_call.1} parent=1 // pred_check
      _
    $region31: #{tpu_custom_call.1} parent=1 // pred_check_branch
      %87 = sbr.rel (0) target = $region33
    $region32: #{tpu_custom_call.1} parent=1 // pred_region
      %88 = dma.done [#allocation4], 128
    $region33: #{tpu_custom_call.1} parent=1 // pred_fallthru
      _
    // Predicated region
    $region34: #{tpu_custom_call.1} parent=1 // pred_check
      _
    $region35: #{tpu_custom_call.1} parent=1 // pred_check_branch
      %90 = sbr.rel (0) target = $region37
    $region36: #{tpu_custom_call.1} parent=1 // pred_region
      %91 = dma.done [#allocation7], 128
    $region37: #{tpu_custom_call.1} parent=1 // pred_fallthru
      _
    // Predicated region
    $region38: #{tpu_custom_call.1} parent=1 // pred_check
      _
    $region39: #{tpu_custom_call.1} parent=1 // pred_check_branch
      %93 = sbr.rel (0) target = $region41
    $region40: #{tpu_custom_call.1} parent=1 // pred_region
      %94 = dma.done [#allocation7], 8192
    $region41: #{tpu_custom_call.1} parent=1 // pred_fallthru
      _
    // Predicated region
    $region42: #{tpu_custom_call.1} parent=1 // pred_check
      _
    $region43: #{tpu_custom_call.1} parent=1 // pred_check_branch
      %96 = sbr.rel (0) target = $region45
    $region44: #{tpu_custom_call.1} parent=1 // pred_region
      %97 = dma.done [#allocation10], 32768
    $region45: #{tpu_custom_call.1} parent=1 // pred_fallthru
      _
    // Predicated region
    $region46: #{tpu_custom_call.1} parent=1 // pred_check
      _
    $region47: #{tpu_custom_call.1} parent=1 // pred_check_branch
      %99 = sbr.rel (0) target = $region49
    $region48: #{tpu_custom_call.1} parent=1 // pred_region
      %100 = dma.done [#allocation10], 4096
    $region49: #{tpu_custom_call.1} parent=1 // pred_fallthru
      _
    // Predicated region
    $region50: #{tpu_custom_call.1} parent=1 // pred_check
      _
    $region51: #{tpu_custom_call.1} parent=1 // pred_check_branch
      %102 = sbr.rel (0) target = $region53
    $region52: #{tpu_custom_call.1} parent=1 // pred_region
      %103 = dma.done [#allocation13], 400
    $region53: #{tpu_custom_call.1} parent=1 // pred_fallthru
      _
    %v105 = vld [vmem:[#allocation3] sm:$0xff]
    %v106 = vpack.c.bf16 %v105, %v105
    %v107 = vld [vmem:[#allocation8] sm:$0xff]
    %v108 = vld [vmem:[#allocation8 + $0x8] sm:$0xff]
    %v109 = vld [vmem:[#allocation8 + $0x10] sm:$0xff]
    %v110 = vld [vmem:[#allocation8 + $0x18] sm:$0xff]
    %v111 = vld [vmem:[#allocation8 + $0x20] sm:$0xff]
    %v112 = vld [vmem:[#allocation8 + $0x28] sm:$0xff]
    %v113 = vld [vmem:[#allocation8 + $0x30] sm:$0xff]
    %v114 = vld [vmem:[#allocation8 + $0x38] sm:$0xff]
    %v115 = vld [vmem:[#allocation8 + $0x40] sm:$0xff]
    %v116 = vld [vmem:[#allocation8 + $0x48] sm:$0xff]
    %v117 = vld [vmem:[#allocation8 + $0x50] sm:$0xff]
    %v118 = vld [vmem:[#allocation8 + $0x58] sm:$0xff]
    %v119 = vld [vmem:[#allocation8 + $0x60] sm:$0xff]
    %v120 = vld [vmem:[#allocation8 + $0x68] sm:$0xff]
    %v121 = vld [vmem:[#allocation8 + $0x70] sm:$0xff]
    %v122 = vld [vmem:[#allocation8 + $0x78] sm:$0xff]
    %v123 = vld [vmem:[#allocation8 + $0x80] sm:$0xff]
    %v124 = vld [vmem:[#allocation8 + $0x88] sm:$0xff]
    %v125 = vld [vmem:[#allocation8 + $0x90] sm:$0xff]
    %v126 = vld [vmem:[#allocation8 + $0x98] sm:$0xff]
    %v127 = vld [vmem:[#allocation8 + $0xa0] sm:$0xff]
    %v128 = vld [vmem:[#allocation8 + $0xa8] sm:$0xff]
    %v129 = vld [vmem:[#allocation8 + $0xb0] sm:$0xff]
    %v130 = vld [vmem:[#allocation8 + $0xb8] sm:$0xff]
    %v131 = vld [vmem:[#allocation8 + $0xc0] sm:$0xff]
    %v132 = vld [vmem:[#allocation8 + $0xc8] sm:$0xff]
    %v133 = vld [vmem:[#allocation8 + $0xd0] sm:$0xff]
    %v134 = vld [vmem:[#allocation8 + $0xd8] sm:$0xff]
    %v135 = vld [vmem:[#allocation8 + $0xe0] sm:$0xff]
    %v136 = vld [vmem:[#allocation8 + $0xe8] sm:$0xff]
    %v137 = vld [vmem:[#allocation8 + $0xf0] sm:$0xff]
    %v138 = vld [vmem:[#allocation8 + $0xf8] sm:$0xff]
    %v139 = vld [vmem:[#allocation8 + $0x100] sm:$0xff]
    %v140 = vld [vmem:[#allocation8 + $0x108] sm:$0xff]
    %v141 = vld [vmem:[#allocation8 + $0x110] sm:$0xff]
    %v142 = vld [vmem:[#allocation8 + $0x118] sm:$0xff]
    %v143 = vld [vmem:[#allocation8 + $0x120] sm:$0xff]
    %v144 = vld [vmem:[#allocation8 + $0x128] sm:$0xff]
    %v145 = vld [vmem:[#allocation8 + $0x130] sm:$0xff]
    %v146 = vld [vmem:[#allocation8 + $0x138] sm:$0xff]
    %v147 = vld [vmem:[#allocation8 + $0x140] sm:$0xff]
    %v148 = vld [vmem:[#allocation8 + $0x148] sm:$0xff]
    %v149 = vld [vmem:[#allocation8 + $0x150] sm:$0xff]
    %v150 = vld [vmem:[#allocation8 + $0x158] sm:$0xff]
    %v151 = vld [vmem:[#allocation8 + $0x160] sm:$0xff]
    %v152 = vld [vmem:[#allocation8 + $0x168] sm:$0xff]
    %v153 = vld [vmem:[#allocation8 + $0x170] sm:$0xff]
    %v154 = vld [vmem:[#allocation8 + $0x178] sm:$0xff]
    %v155 = vld [vmem:[#allocation8 + $0x180] sm:$0xff]
    %v156 = vld [vmem:[#allocation8 + $0x188] sm:$0xff]
    %v157 = vld [vmem:[#allocation8 + $0x190] sm:$0xff]
    %v158 = vld [vmem:[#allocation8 + $0x198] sm:$0xff]
    %v159 = vld [vmem:[#allocation8 + $0x1a0] sm:$0xff]
    %v160 = vld [vmem:[#allocation8 + $0x1a8] sm:$0xff]
    %v161 = vld [vmem:[#allocation8 + $0x1b0] sm:$0xff]
    %v162 = vld [vmem:[#allocation8 + $0x1b8] sm:$0xff]
    %v163 = vld [vmem:[#allocation8 + $0x1c0] sm:$0xff]
    %v164 = vld [vmem:[#allocation8 + $0x1c8] sm:$0xff]
    %v165 = vld [vmem:[#allocation8 + $0x1d0] sm:$0xff]
    %v166 = vld [vmem:[#allocation8 + $0x1d8] sm:$0xff]
    %v167 = vld [vmem:[#allocation8 + $0x1e0] sm:$0xff]
    %v168 = vld [vmem:[#allocation8 + $0x1e8] sm:$0xff]
    %v169 = vld [vmem:[#allocation8 + $0x1f0] sm:$0xff]
    %v170 = vld [vmem:[#allocation8 + $0x1f8] sm:$0xff]
    %v235 = vunpack.c.l.b16 %v107
    %v236 = vunpack.c.h.b16 %v107
    %v237 = vunpack.c.l.b16 %v108
    %v238 = vunpack.c.h.b16 %v108
    %v239 = vunpack.c.l.b16 %v109
    %v240 = vunpack.c.h.b16 %v109
    %v241 = vunpack.c.l.b16 %v110
    %v242 = vunpack.c.h.b16 %v110
    %v243 = vunpack.c.l.b16 %v111
    %v244 = vunpack.c.h.b16 %v111
    %v245 = vunpack.c.l.b16 %v112
    %v246 = vunpack.c.h.b16 %v112
    %v247 = vunpack.c.l.b16 %v113
    %v248 = vunpack.c.h.b16 %v113
    %v249 = vunpack.c.l.b16 %v114
    %v250 = vunpack.c.h.b16 %v114
    %v251 = vunpack.c.l.b16 %v115
    %v252 = vunpack.c.h.b16 %v115
    %v253 = vunpack.c.l.b16 %v116
    %v254 = vunpack.c.h.b16 %v116
    %v255 = vunpack.c.l.b16 %v117
    %v256 = vunpack.c.h.b16 %v117
    %v257 = vunpack.c.l.b16 %v118
    %v258 = vunpack.c.h.b16 %v118
    %v259 = vunpack.c.l.b16 %v119
    %v260 = vunpack.c.h.b16 %v119
    %v261 = vunpack.c.l.b16 %v120
    %v262 = vunpack.c.h.b16 %v120
    %v263 = vunpack.c.l.b16 %v121
    %v264 = vunpack.c.h.b16 %v121
    %v265 = vunpack.c.l.b16 %v122
    %v266 = vunpack.c.h.b16 %v122
    %v267 = vunpack.c.l.b16 %v123
    %v268 = vunpack.c.h.b16 %v123
    %v269 = vunpack.c.l.b16 %v124
    %v270 = vunpack.c.h.b16 %v124
    %v271 = vunpack.c.l.b16 %v125
    %v272 = vunpack.c.h.b16 %v125
    %v273 = vunpack.c.l.b16 %v126
    %v274 = vunpack.c.h.b16 %v126
    %v275 = vunpack.c.l.b16 %v127
    %v276 = vunpack.c.h.b16 %v127
    %v277 = vunpack.c.l.b16 %v128
    %v278 = vunpack.c.h.b16 %v128
    %v279 = vunpack.c.l.b16 %v129
    %v280 = vunpack.c.h.b16 %v129
    %v281 = vunpack.c.l.b16 %v130
    %v282 = vunpack.c.h.b16 %v130
    %v283 = vunpack.c.l.b16 %v131
    %v284 = vunpack.c.h.b16 %v131
    %v285 = vunpack.c.l.b16 %v132
    %v286 = vunpack.c.h.b16 %v132
    %v287 = vunpack.c.l.b16 %v133
    %v288 = vunpack.c.h.b16 %v133
    %v289 = vunpack.c.l.b16 %v134
    %v290 = vunpack.c.h.b16 %v134
    %v291 = vunpack.c.l.b16 %v135
    %v292 = vunpack.c.h.b16 %v135
    %v293 = vunpack.c.l.b16 %v136
    %v294 = vunpack.c.h.b16 %v136
    %v295 = vunpack.c.l.b16 %v137
    %v296 = vunpack.c.h.b16 %v137
    %v297 = vunpack.c.l.b16 %v138
    %v298 = vunpack.c.h.b16 %v138
    %v299 = vunpack.c.l.b16 %v139
    %v300 = vunpack.c.h.b16 %v139
    %v301 = vunpack.c.l.b16 %v140
    %v302 = vunpack.c.h.b16 %v140
    %v303 = vunpack.c.l.b16 %v141
    %v304 = vunpack.c.h.b16 %v141
    %v305 = vunpack.c.l.b16 %v142
    %v306 = vunpack.c.h.b16 %v142
    %v307 = vunpack.c.l.b16 %v143
    %v308 = vunpack.c.h.b16 %v143
    %v309 = vunpack.c.l.b16 %v144
    %v310 = vunpack.c.h.b16 %v144
    %v311 = vunpack.c.l.b16 %v145
    %v312 = vunpack.c.h.b16 %v145
    %v313 = vunpack.c.l.b16 %v146
    %v314 = vunpack.c.h.b16 %v146
    %v315 = vunpack.c.l.b16 %v147
    %v316 = vunpack.c.h.b16 %v147
    %v317 = vunpack.c.l.b16 %v148
    %v318 = vunpack.c.h.b16 %v148
    %v319 = vunpack.c.l.b16 %v149
    %v320 = vunpack.c.h.b16 %v149
    %v321 = vunpack.c.l.b16 %v150
    %v322 = vunpack.c.h.b16 %v150
    %v323 = vunpack.c.l.b16 %v151
    %v324 = vunpack.c.h.b16 %v151
    %v325 = vunpack.c.l.b16 %v152
    %v326 = vunpack.c.h.b16 %v152
    %v327 = vunpack.c.l.b16 %v153
    %v328 = vunpack.c.h.b16 %v153
    %v329 = vunpack.c.l.b16 %v154
    %v330 = vunpack.c.h.b16 %v154
    %v331 = vunpack.c.l.b16 %v155
    %v332 = vunpack.c.h.b16 %v155
    %v333 = vunpack.c.l.b16 %v156
    %v334 = vunpack.c.h.b16 %v156
    %v335 = vunpack.c.l.b16 %v157
    %v336 = vunpack.c.h.b16 %v157
    %v337 = vunpack.c.l.b16 %v158
    %v338 = vunpack.c.h.b16 %v158
    %v339 = vunpack.c.l.b16 %v159
    %v340 = vunpack.c.h.b16 %v159
    %v341 = vunpack.c.l.b16 %v160
    %v342 = vunpack.c.h.b16 %v160
    %v343 = vunpack.c.l.b16 %v161
    %v344 = vunpack.c.h.b16 %v161
    %v345 = vunpack.c.l.b16 %v162
    %v346 = vunpack.c.h.b16 %v162
    %v347 = vunpack.c.l.b16 %v163
    %v348 = vunpack.c.h.b16 %v163
    %v349 = vunpack.c.l.b16 %v164
    %v350 = vunpack.c.h.b16 %v164
    %v351 = vunpack.c.l.b16 %v165
    %v352 = vunpack.c.h.b16 %v165
    %v353 = vunpack.c.l.b16 %v166
    %v354 = vunpack.c.h.b16 %v166
    %v355 = vunpack.c.l.b16 %v167
    %v356 = vunpack.c.h.b16 %v167
    %v357 = vunpack.c.l.b16 %v168
    %v358 = vunpack.c.h.b16 %v168
    %v359 = vunpack.c.l.b16 %v169
    %v360 = vunpack.c.h.b16 %v169
    %v361 = vunpack.c.l.b16 %v170
    %v362 = vunpack.c.h.b16 %v170
    %v363 = vpack.c.b16 %v243, %v235
    %v364 = vpack.c.b16 %v244, %v236
    %v365 = vpack.c.b16 %v245, %v237
    %v366 = vpack.c.b16 %v246, %v238
    %v367 = vpack.c.b16 %v247, %v239
    %v368 = vpack.c.b16 %v248, %v240
    %v369 = vpack.c.b16 %v249, %v241
    %v370 = vpack.c.b16 %v250, %v242
    %v371 = vpack.c.b16 %v259, %v251
    %v372 = vpack.c.b16 %v260, %v252
    %v373 = vpack.c.b16 %v261, %v253
    %v374 = vpack.c.b16 %v262, %v254
    %v375 = vpack.c.b16 %v263, %v255
    %v376 = vpack.c.b16 %v264, %v256
    %v377 = vpack.c.b16 %v265, %v257
    %v378 = vpack.c.b16 %v266, %v258
    %v379 = vpack.c.b16 %v275, %v267
    %v380 = vpack.c.b16 %v276, %v268
    %v381 = vpack.c.b16 %v277, %v269
    %v382 = vpack.c.b16 %v278, %v270
    %v383 = vpack.c.b16 %v279, %v271
    %v384 = vpack.c.b16 %v280, %v272
    %v385 = vpack.c.b16 %v281, %v273
    %v386 = vpack.c.b16 %v282, %v274
    %v387 = vpack.c.b16 %v291, %v283
    %v388 = vpack.c.b16 %v292, %v284
    %v389 = vpack.c.b16 %v293, %v285
    %v390 = vpack.c.b16 %v294, %v286
    %v391 = vpack.c.b16 %v295, %v287
    %v392 = vpack.c.b16 %v296, %v288
    %v393 = vpack.c.b16 %v297, %v289
    %v394 = vpack.c.b16 %v298, %v290
    %v395 = vpack.c.b16 %v307, %v299
    %v396 = vpack.c.b16 %v308, %v300
    %v397 = vpack.c.b16 %v309, %v301
    %v398 = vpack.c.b16 %v310, %v302
    %v399 = vpack.c.b16 %v311, %v303
    %v400 = vpack.c.b16 %v312, %v304
    %v401 = vpack.c.b16 %v313, %v305
    %v402 = vpack.c.b16 %v314, %v306
    %v403 = vpack.c.b16 %v323, %v315
    %v404 = vpack.c.b16 %v324, %v316
    %v405 = vpack.c.b16 %v325, %v317
    %v406 = vpack.c.b16 %v326, %v318
    %v407 = vpack.c.b16 %v327, %v319
    %v408 = vpack.c.b16 %v328, %v320
    %v409 = vpack.c.b16 %v329, %v321
    %v410 = vpack.c.b16 %v330, %v322
    %v411 = vpack.c.b16 %v339, %v331
    %v412 = vpack.c.b16 %v340, %v332
    %v413 = vpack.c.b16 %v341, %v333
    %v414 = vpack.c.b16 %v342, %v334
    %v415 = vpack.c.b16 %v343, %v335
    %v416 = vpack.c.b16 %v344, %v336
    %v417 = vpack.c.b16 %v345, %v337
    %v418 = vpack.c.b16 %v346, %v338
    %v419 = vpack.c.b16 %v355, %v347
    %v420 = vpack.c.b16 %v356, %v348
    %v421 = vpack.c.b16 %v357, %v349
    %v422 = vpack.c.b16 %v358, %v350
    %v423 = vpack.c.b16 %v359, %v351
    %v424 = vpack.c.b16 %v360, %v352
    %v425 = vpack.c.b16 %v361, %v353
    %v426 = vpack.c.b16 %v362, %v354
    %491 = vmatprep.subr.bf16.mxu0 %v364
    %492 = vmatpush1.bf16.msra.mxu0 %v363
    %493 = vmatprep.subr.bf16.mxu0 %v372
    %494 = vmatpush1.bf16.msra.mxu0 %v371
    %495 = vmatprep.subr.bf16.mxu0 %v380
    %496 = vmatpush1.bf16.msra.mxu0 %v379
    %497 = vmatprep.subr.bf16.mxu0 %v388
    %498 = vmatpush1.bf16.msra.mxu0 %v387
    %499 = vmatprep.subr.bf16.mxu0 %v396
    %500 = vmatpush1.bf16.msra.mxu0 %v395
    %501 = vmatprep.subr.bf16.mxu0 %v404
    %502 = vmatpush1.bf16.msra.mxu0 %v403
    %503 = vmatprep.subr.bf16.mxu0 %v412
    %504 = vmatpush1.bf16.msra.mxu0 %v411
    %505 = vmatprep.subr.bf16.mxu0 %v420
    %506 = vmatpush1.bf16.msra.mxu0 %v419
    %507 = vmatprep.subr.bf16.mxu0 0
    %508 = vmatpush1.bf16.msra.mxu0 0
    %509 = vmatprep.subr.bf16.mxu0 0
    %510 = vmatpush1.bf16.msra.mxu0 0
    %511 = vmatprep.subr.bf16.mxu0 0
    %512 = vmatpush1.bf16.msra.mxu0 0
    %513 = vmatprep.subr.bf16.mxu0 0
    %514 = vmatpush1.bf16.msra.mxu0 0
    %515 = vmatprep.subr.bf16.mxu0 0
    %516 = vmatpush1.bf16.msra.mxu0 0
    %517 = vmatprep.subr.bf16.mxu0 0
    %518 = vmatpush1.bf16.msra.mxu0 0
    %519 = vmatprep.subr.bf16.mxu0 0
    %520 = vmatpush1.bf16.msra.mxu0 0
    %521 = vmatprep.subr.bf16.mxu0 0
    %522 = vmatpush1.bf16.msra.mxu0 0
    %523 = vmatprep.mubr.bf16.mxu0 0
    %524 = vmatmul.mubr.bf16.gmra.mrb[0].mxu0 %v106
    %v525 = vpop.f32.mrb[0].mxu0
    %v526 = vadd.f32 0.0, %v525
    %v527 = vpop.f32.mrb[0].mxu0
    %v528 = vadd.f32 0.0, %v527
    %v529 = vpop.f32.mrb[0].mxu0
    %v530 = vpop.f32.mrb[0].mxu0
    %531 = vdwg.mxu0
    %532 = vmatprep.subr.bf16.mxu0 %v366
    %533 = vmatpush1.bf16.msra.mxu0 %v365
    %534 = vmatprep.subr.bf16.mxu0 %v374
    %535 = vmatpush1.bf16.msra.mxu0 %v373
    %536 = vmatprep.subr.bf16.mxu0 %v382
    %537 = vmatpush1.bf16.msra.mxu0 %v381
    %538 = vmatprep.subr.bf16.mxu0 %v390
    %539 = vmatpush1.bf16.msra.mxu0 %v389
    %540 = vmatprep.subr.bf16.mxu0 %v398
    %541 = vmatpush1.bf16.msra.mxu0 %v397
    %542 = vmatprep.subr.bf16.mxu0 %v406
    %543 = vmatpush1.bf16.msra.mxu0 %v405
    %544 = vmatprep.subr.bf16.mxu0 %v414
    %545 = vmatpush1.bf16.msra.mxu0 %v413
    %546 = vmatprep.subr.bf16.mxu0 %v422
    %547 = vmatpush1.bf16.msra.mxu0 %v421
    %548 = vmatprep.subr.bf16.mxu0 0
    %549 = vmatpush1.bf16.msra.mxu0 0
    %550 = vmatprep.subr.bf16.mxu0 0
    %551 = vmatpush1.bf16.msra.mxu0 0
    %552 = vmatprep.subr.bf16.mxu0 0
    %553 = vmatpush1.bf16.msra.mxu0 0
    %554 = vmatprep.subr.bf16.mxu0 0
    %555 = vmatpush1.bf16.msra.mxu0 0
    %556 = vmatprep.subr.bf16.mxu0 0
    %557 = vmatpush1.bf16.msra.mxu0 0
    %558 = vmatprep.subr.bf16.mxu0 0
    %559 = vmatpush1.bf16.msra.mxu0 0
    %560 = vmatprep.subr.bf16.mxu0 0
    %561 = vmatpush1.bf16.msra.mxu0 0
    %562 = vmatprep.subr.bf16.mxu0 0
    %563 = vmatpush1.bf16.msra.mxu0 0
    %564 = vmatprep.mubr.bf16.mxu0 0
    %565 = vmatmul.mubr.bf16.gmra.mrb[0].mxu0 %v106
    %v566 = vpop.f32.mrb[0].mxu0
    %v567 = vadd.f32 0.0, %v566
    %v568 = vpop.f32.mrb[0].mxu0
    %v569 = vadd.f32 0.0, %v568
    %v570 = vpop.f32.mrb[0].mxu0
    %v571 = vpop.f32.mrb[0].mxu0
    %572 = vdwg.mxu0
    %573 = vmatprep.subr.bf16.mxu0 %v368
    %574 = vmatpush1.bf16.msra.mxu0 %v367
    %575 = vmatprep.subr.bf16.mxu0 %v376
    %576 = vmatpush1.bf16.msra.mxu0 %v375
    %577 = vmatprep.subr.bf16.mxu0 %v384
    %578 = vmatpush1.bf16.msra.mxu0 %v383
    %579 = vmatprep.subr.bf16.mxu0 %v392
    %580 = vmatpush1.bf16.msra.mxu0 %v391
    %581 = vmatprep.subr.bf16.mxu0 %v400
    %582 = vmatpush1.bf16.msra.mxu0 %v399
    %583 = vmatprep.subr.bf16.mxu0 %v408
    %584 = vmatpush1.bf16.msra.mxu0 %v407
    %585 = vmatprep.subr.bf16.mxu0 %v416
    %586 = vmatpush1.bf16.msra.mxu0 %v415
    %587 = vmatprep.subr.bf16.mxu0 %v424
    %588 = vmatpush1.bf16.msra.mxu0 %v423
    %589 = vmatprep.subr.bf16.mxu0 0
    %590 = vmatpush1.bf16.msra.mxu0 0
    %591 = vmatprep.subr.bf16.mxu0 0
    %592 = vmatpush1.bf16.msra.mxu0 0
    %593 = vmatprep.subr.bf16.mxu0 0
    %594 = vmatpush1.bf16.msra.mxu0 0
    %595 = vmatprep.subr.bf16.mxu0 0
    %596 = vmatpush1.bf16.msra.mxu0 0
    %597 = vmatprep.subr.bf16.mxu0 0
    %598 = vmatpush1.bf16.msra.mxu0 0
    %599 = vmatprep.subr.bf16.mxu0 0
    %600 = vmatpush1.bf16.msra.mxu0 0
    %601 = vmatprep.subr.bf16.mxu0 0
    %602 = vmatpush1.bf16.msra.mxu0 0
    %603 = vmatprep.subr.bf16.mxu0 0
    %604 = vmatpush1.bf16.msra.mxu0 0
    %605 = vmatprep.mubr.bf16.mxu0 0
    %606 = vmatmul.mubr.bf16.gmra.mrb[0].mxu0 %v106
    %v607 = vpop.f32.mrb[0].mxu0
    %v608 = vadd.f32 0.0, %v607
    %v609 = vpop.f32.mrb[0].mxu0
    %v610 = vadd.f32 0.0, %v609
    %v611 = vpop.f32.mrb[0].mxu0
    %v612 = vpop.f32.mrb[0].mxu0
    %613 = vdwg.mxu0
    %614 = vmatprep.subr.bf16.mxu0 %v370
    %615 = vmatpush1.bf16.msra.mxu0 %v369
    %616 = vmatprep.subr.bf16.mxu0 %v378
    %617 = vmatpush1.bf16.msra.mxu0 %v377
    %618 = vmatprep.subr.bf16.mxu0 %v386
    %619 = vmatpush1.bf16.msra.mxu0 %v385
    %620 = vmatprep.subr.bf16.mxu0 %v394
    %621 = vmatpush1.bf16.msra.mxu0 %v393
    %622 = vmatprep.subr.bf16.mxu0 %v402
    %623 = vmatpush1.bf16.msra.mxu0 %v401
    %624 = vmatprep.subr.bf16.mxu0 %v410
    %625 = vmatpush1.bf16.msra.mxu0 %v409
    %626 = vmatprep.subr.bf16.mxu0 %v418
    %627 = vmatpush1.bf16.msra.mxu0 %v417
    %628 = vmatprep.subr.bf16.mxu0 %v426
    %629 = vmatpush1.bf16.msra.mxu0 %v425
    %630 = vmatprep.subr.bf16.mxu0 0
    %631 = vmatpush1.bf16.msra.mxu0 0
    %632 = vmatprep.subr.bf16.mxu0 0
    %633 = vmatpush1.bf16.msra.mxu0 0
    %634 = vmatprep.subr.bf16.mxu0 0
    %635 = vmatpush1.bf16.msra.mxu0 0
    %636 = vmatprep.subr.bf16.mxu0 0
    %637 = vmatpush1.bf16.msra.mxu0 0
    %638 = vmatprep.subr.bf16.mxu0 0
    %639 = vmatpush1.bf16.msra.mxu0 0
    %640 = vmatprep.subr.bf16.mxu0 0
    %641 = vmatpush1.bf16.msra.mxu0 0
    %642 = vmatprep.subr.bf16.mxu0 0
    %643 = vmatpush1.bf16.msra.mxu0 0
    %644 = vmatprep.subr.bf16.mxu0 0
    %645 = vmatpush1.bf16.msra.mxu0 0
    %646 = vmatprep.mubr.bf16.mxu0 0
    %647 = vmatmul.mubr.bf16.gmra.mrb[0].mxu0 %v106
    %v648 = vpop.f32.mrb[0].mxu0
    %v649 = vadd.f32 0.0, %v648
    %v650 = vpop.f32.mrb[0].mxu0
    %v651 = vadd.f32 0.0, %v650
    %v652 = vpop.f32.mrb[0].mxu0
    %v653 = vpop.f32.mrb[0].mxu0
    %654 = vdwg.mxu0
    %v655 = vld [vmem:[#allocation12] sm:$0xff]
    %v656 = vld [vmem:[#allocation12 + $0x8] sm:$0xff]
    %v657 = vrot.slane %v526, 4
    %v658 = vadd.f32 %v526, %v657
    %v659 = vrot.slane %v658, 2
    %v660 = vadd.f32 %v658, %v659
    %v661 = vrot.slane %v660, 1
    %v662 = vadd.f32 %v660, %v661
    %v663 = vrot.slane %v528, 4
    %v664 = vadd.f32 %v528, %v663
    %v665 = vrot.slane %v664, 2
    %v666 = vadd.f32 %v664, %v665
    %v667 = vrot.slane %v666, 1
    %v668 = vadd.f32 %v666, %v667
    %v669 = vrot.slane %v567, 4
    %v670 = vadd.f32 %v567, %v669
    %v671 = vrot.slane %v670, 2
    %v672 = vadd.f32 %v670, %v671
    %v673 = vrot.slane %v672, 1
    %v674 = vadd.f32 %v672, %v673
    %v675 = vrot.slane %v569, 4
    %v676 = vadd.f32 %v569, %v675
    %v677 = vrot.slane %v676, 2
    %v678 = vadd.f32 %v676, %v677
    %v679 = vrot.slane %v678, 1
    %v680 = vadd.f32 %v678, %v679
    %v681 = vrot.slane %v608, 4
    %v682 = vadd.f32 %v608, %v681
    %v683 = vrot.slane %v682, 2
    %v684 = vadd.f32 %v682, %v683
    %v685 = vrot.slane %v684, 1
    %v686 = vadd.f32 %v684, %v685
    %v687 = vrot.slane %v610, 4
    %v688 = vadd.f32 %v610, %v687
    %v689 = vrot.slane %v688, 2
    %v690 = vadd.f32 %v688, %v689
    %v691 = vrot.slane %v690, 1
    %v692 = vadd.f32 %v690, %v691
    %v693 = vrot.slane %v649, 4
    %v694 = vadd.f32 %v649, %v693
    %v695 = vrot.slane %v694, 2
    %v696 = vadd.f32 %v694, %v695
    %v697 = vrot.slane %v696, 1
    %v698 = vadd.f32 %v696, %v697
    %v699 = vrot.slane %v651, 4
    %v700 = vadd.f32 %v651, %v699
    %v701 = vrot.slane %v700, 2
    %v702 = vadd.f32 %v700, %v701
    %v703 = vrot.slane %v702, 1
    %v704 = vadd.f32 %v702, %v703
    %v705 = vrcp.pop 8.0
    %v706 = vmul.f32 %v662, %v705
    %v707 = vmul.f32 %v668, %v705
    %v708 = vmul.f32 %v674, %v705
    %v709 = vmul.f32 %v680, %v705
    %v710 = vmul.f32 %v686, %v705
    %v711 = vmul.f32 %v692, %v705
    %v712 = vmul.f32 %v698, %v705
    %v713 = vmul.f32 %v704, %v705
    %v714 = vsub.f32 %v526, %v706
    %v715 = vsub.f32 %v528, %v707
    %v716 = vsub.f32 %v567, %v708
    %v717 = vsub.f32 %v569, %v709
    %v718 = vsub.f32 %v608, %v710
    %v719 = vsub.f32 %v610, %v711
    %v720 = vsub.f32 %v649, %v712
    %v721 = vsub.f32 %v651, %v713
    %v722 = vmul.f32 %v714, %v714
    %v723 = vmul.f32 %v715, %v715
    %v724 = vmul.f32 %v716, %v716
    %v725 = vmul.f32 %v717, %v717
    %v726 = vmul.f32 %v718, %v718
    %v727 = vmul.f32 %v719, %v719
    %v728 = vmul.f32 %v720, %v720
    %v729 = vmul.f32 %v721, %v721
    %v730 = vrot.slane %v722, 4
    %v731 = vadd.f32 %v722, %v730
    %v732 = vrot.slane %v731, 2
    %v733 = vadd.f32 %v731, %v732
    %v734 = vrot.slane %v733, 1
    %v735 = vadd.f32 %v733, %v734
    %v736 = vrot.slane %v723, 4
    %v737 = vadd.f32 %v723, %v736
    %v738 = vrot.slane %v737, 2
    %v739 = vadd.f32 %v737, %v738
    %v740 = vrot.slane %v739, 1
    %v741 = vadd.f32 %v739, %v740
    %v742 = vrot.slane %v724, 4
    %v743 = vadd.f32 %v724, %v742
    %v744 = vrot.slane %v743, 2
    %v745 = vadd.f32 %v743, %v744
    %v746 = vrot.slane %v745, 1
    %v747 = vadd.f32 %v745, %v746
    %v748 = vrot.slane %v725, 4
    %v749 = vadd.f32 %v725, %v748
    %v750 = vrot.slane %v749, 2
    %v751 = vadd.f32 %v749, %v750
    %v752 = vrot.slane %v751, 1
    %v753 = vadd.f32 %v751, %v752
    %v754 = vrot.slane %v726, 4
    %v755 = vadd.f32 %v726, %v754
    %v756 = vrot.slane %v755, 2
    %v757 = vadd.f32 %v755, %v756
    %v758 = vrot.slane %v757, 1
    %v759 = vadd.f32 %v757, %v758
    %v760 = vrot.slane %v727, 4
    %v761 = vadd.f32 %v727, %v760
    %v762 = vrot.slane %v761, 2
    %v763 = vadd.f32 %v761, %v762
    %v764 = vrot.slane %v763, 1
    %v765 = vadd.f32 %v763, %v764
    %v766 = vrot.slane %v728, 4
    %v767 = vadd.f32 %v728, %v766
    %v768 = vrot.slane %v767, 2
    %v769 = vadd.f32 %v767, %v768
    %v770 = vrot.slane %v769, 1
    %v771 = vadd.f32 %v769, %v770
    %v772 = vrot.slane %v729, 4
    %v773 = vadd.f32 %v729, %v772
    %v774 = vrot.slane %v773, 2
    %v775 = vadd.f32 %v773, %v774
    %v776 = vrot.slane %v775, 1
    %v777 = vadd.f32 %v775, %v776
    %v778 = vmul.f32 %v735, %v705
    %v779 = vmul.f32 %v741, %v705
    %v780 = vmul.f32 %v747, %v705
    %v781 = vmul.f32 %v753, %v705
    %v782 = vmul.f32 %v759, %v705
    %v783 = vmul.f32 %v765, %v705
    %v784 = vmul.f32 %v771, %v705
    %v785 = vmul.f32 %v777, %v705
    %v786 = vadd.f32 %v778, 1e-05
    %v787 = vadd.f32 %v779, 1e-05
    %v788 = vadd.f32 %v780, 1e-05
    %v789 = vadd.f32 %v781, 1e-05
    %v790 = vadd.f32 %v782, 1e-05
    %v791 = vadd.f32 %v783, 1e-05
    %v792 = vadd.f32 %v784, 1e-05
    %v793 = vadd.f32 %v785, 1e-05
    %v794 = vrsqrt.pop %v786
    %v795 = vrsqrt.pop %v787
    %v796 = vrsqrt.pop %v788
    %v797 = vrsqrt.pop %v789
    %v798 = vrsqrt.pop %v790
    %v799 = vrsqrt.pop %v791
    %v800 = vrsqrt.pop %v792
    %v801 = vrsqrt.pop %v793
    %v802 = vmul.f32 %v714, %v794
    %v803 = vmul.f32 %v715, %v795
    %v804 = vmul.f32 %v716, %v796
    %v805 = vmul.f32 %v717, %v797
    %v806 = vmul.f32 %v718, %v798
    %v807 = vmul.f32 %v719, %v799
    %v808 = vmul.f32 %v720, %v800
    %v809 = vmul.f32 %v721, %v801
    %v811 = vlaneseq
    %v812 = vshrl.u32 %v811, 7
    %v813 = vsub.s32 0, %v812
    %v814 = vrot.slane %v655, %v813
    %v815 = vlaneseq
    %v816 = vshrl.u32 %v815, 7
    %v817 = vsub.s32 1, %v816
    %v818 = vrot.slane %v655, %v817
    %v819 = vlaneseq
    %v820 = vshrl.u32 %v819, 7
    %v821 = vsub.s32 2, %v820
    %v822 = vrot.slane %v655, %v821
    %v823 = vlaneseq
    %v824 = vshrl.u32 %v823, 7
    %v825 = vsub.s32 3, %v824
    %v826 = vrot.slane %v655, %v825
    %v827 = vlaneseq
    %v828 = vshrl.u32 %v827, 7
    %v829 = vsub.s32 4, %v828
    %v830 = vrot.slane %v655, %v829
    %v831 = vlaneseq
    %v832 = vshrl.u32 %v831, 7
    %v833 = vsub.s32 5, %v832
    %v834 = vrot.slane %v655, %v833
    %v835 = vlaneseq
    %v836 = vshrl.u32 %v835, 7
    %v837 = vsub.s32 6, %v836
    %v838 = vrot.slane %v655, %v837
    %v839 = vlaneseq
    %v840 = vshrl.u32 %v839, 7
    %v841 = vsub.s32 7, %v840
    %v842 = vrot.slane %v655, %v841
    %v851 = vmul.f32 %v802, %v814
    %v852 = vmul.f32 %v803, %v818
    %v853 = vmul.f32 %v804, %v822
    %v854 = vmul.f32 %v805, %v826
    %v855 = vmul.f32 %v806, %v830
    %v856 = vmul.f32 %v807, %v834
    %v857 = vmul.f32 %v808, %v838
    %v858 = vmul.f32 %v809, %v842
    %v860 = vlaneseq
    %v861 = vshrl.u32 %v860, 7
    %v862 = vsub.s32 0, %v861
    %v863 = vrot.slane %v656, %v862
    %v864 = vlaneseq
    %v865 = vshrl.u32 %v864, 7
    %v866 = vsub.s32 1, %v865
    %v867 = vrot.slane %v656, %v866
    %v868 = vlaneseq
    %v869 = vshrl.u32 %v868, 7
    %v870 = vsub.s32 2, %v869
    %v871 = vrot.slane %v656, %v870
    %v872 = vlaneseq
    %v873 = vshrl.u32 %v872, 7
    %v874 = vsub.s32 3, %v873
    %v875 = vrot.slane %v656, %v874
    %v876 = vlaneseq
    %v877 = vshrl.u32 %v876, 7
    %v878 = vsub.s32 4, %v877
    %v879 = vrot.slane %v656, %v878
    %v880 = vlaneseq
    %v881 = vshrl.u32 %v880, 7
    %v882 = vsub.s32 5, %v881
    %v883 = vrot.slane %v656, %v882
    %v884 = vlaneseq
    %v885 = vshrl.u32 %v884, 7
    %v886 = vsub.s32 6, %v885
    %v887 = vrot.slane %v656, %v886
    %v888 = vlaneseq
    %v889 = vshrl.u32 %v888, 7
    %v890 = vsub.s32 7, %v889
    %v891 = vrot.slane %v656, %v890
    %v900 = vadd.f32 %v851, %v863
    %v901 = vadd.f32 %v852, %v867
    %v902 = vadd.f32 %v853, %v871
    %v903 = vadd.f32 %v854, %v875
    %v904 = vadd.f32 %v855, %v879
    %v905 = vadd.f32 %v856, %v883
    %v906 = vadd.f32 %v857, %v887
    %v907 = vadd.f32 %v858, %v891
    %v908 = vmax.f32 %v900, 0.0
    %v909 = vmax.f32 %v901, 0.0
    %v910 = vmax.f32 %v902, 0.0
    %v911 = vmax.f32 %v903, 0.0
    %v912 = vmax.f32 %v904, 0.0
    %v913 = vmax.f32 %v905, 0.0
    %v914 = vmax.f32 %v906, 0.0
    %v915 = vmax.f32 %v907, 0.0
    %v916 = vpack.c.bf16 %v908, %v908
    %v917 = vpack.c.bf16 %v909, %v909
    %v918 = vpack.c.bf16 %v910, %v910
    %v919 = vpack.c.bf16 %v911, %v911
    %v920 = vpack.c.bf16 %v912, %v912
    %v921 = vpack.c.bf16 %v913, %v913
    %v922 = vpack.c.bf16 %v914, %v914
    %v923 = vpack.c.bf16 %v915, %v915
    %v924 = vld [vmem:[#allocation9] sm:$0xff]
    %v925 = vld [vmem:[#allocation9 + $0x8] sm:$0xff]
    %v926 = vld [vmem:[#allocation9 + $0x10] sm:$0xff]
    %v927 = vld [vmem:[#allocation9 + $0x18] sm:$0xff]
    %v928 = vld [vmem:[#allocation9 + $0x20] sm:$0xff]
    %v929 = vld [vmem:[#allocation9 + $0x28] sm:$0xff]
    %v930 = vld [vmem:[#allocation9 + $0x30] sm:$0xff]
    %v931 = vld [vmem:[#allocation9 + $0x38] sm:$0xff]
    %v932 = vld [vmem:[#allocation9 + $0x40] sm:$0xff]
    %v933 = vld [vmem:[#allocation9 + $0x48] sm:$0xff]
    %v934 = vld [vmem:[#allocation9 + $0x50] sm:$0xff]
    %v935 = vld [vmem:[#allocation9 + $0x58] sm:$0xff]
    %v936 = vld [vmem:[#allocation9 + $0x60] sm:$0xff]
    %v937 = vld [vmem:[#allocation9 + $0x68] sm:$0xff]
    %v938 = vld [vmem:[#allocation9 + $0x70] sm:$0xff]
    %v939 = vld [vmem:[#allocation9 + $0x78] sm:$0xff]
    %v940 = vld [vmem:[#allocation9 + $0x80] sm:$0xff]
    %v941 = vld [vmem:[#allocation9 + $0x88] sm:$0xff]
    %v942 = vld [vmem:[#allocation9 + $0x90] sm:$0xff]
    %v943 = vld [vmem:[#allocation9 + $0x98] sm:$0xff]
    %v944 = vld [vmem:[#allocation9 + $0xa0] sm:$0xff]
    %v945 = vld [vmem:[#allocation9 + $0xa8] sm:$0xff]
    %v946 = vld [vmem:[#allocation9 + $0xb0] sm:$0xff]
    %v947 = vld [vmem:[#allocation9 + $0xb8] sm:$0xff]
    %v948 = vld [vmem:[#allocation9 + $0xc0] sm:$0xff]
    %v949 = vld [vmem:[#allocation9 + $0xc8] sm:$0xff]
    %v950 = vld [vmem:[#allocation9 + $0xd0] sm:$0xff]
    %v951 = vld [vmem:[#allocation9 + $0xd8] sm:$0xff]
    %v952 = vld [vmem:[#allocation9 + $0xe0] sm:$0xff]
    %v953 = vld [vmem:[#allocation9 + $0xe8] sm:$0xff]
    %v954 = vld [vmem:[#allocation9 + $0xf0] sm:$0xff]
    %v955 = vld [vmem:[#allocation9 + $0xf8] sm:$0xff]
    %v956 = vld [vmem:[#allocation9 + $0x100] sm:$0xff]
    %v957 = vld [vmem:[#allocation9 + $0x108] sm:$0xff]
    %v958 = vld [vmem:[#allocation9 + $0x110] sm:$0xff]
    %v959 = vld [vmem:[#allocation9 + $0x118] sm:$0xff]
    %v960 = vld [vmem:[#allocation9 + $0x120] sm:$0xff]
    %v961 = vld [vmem:[#allocation9 + $0x128] sm:$0xff]
    %v962 = vld [vmem:[#allocation9 + $0x130] sm:$0xff]
    %v963 = vld [vmem:[#allocation9 + $0x138] sm:$0xff]
    %v964 = vld [vmem:[#allocation9 + $0x140] sm:$0xff]
    %v965 = vld [vmem:[#allocation9 + $0x148] sm:$0xff]
    %v966 = vld [vmem:[#allocation9 + $0x150] sm:$0xff]
    %v967 = vld [vmem:[#allocation9 + $0x158] sm:$0xff]
    %v968 = vld [vmem:[#allocation9 + $0x160] sm:$0xff]
    %v969 = vld [vmem:[#allocation9 + $0x168] sm:$0xff]
    %v970 = vld [vmem:[#allocation9 + $0x170] sm:$0xff]
    %v971 = vld [vmem:[#allocation9 + $0x178] sm:$0xff]
    %v972 = vld [vmem:[#allocation9 + $0x180] sm:$0xff]
    %v973 = vld [vmem:[#allocation9 + $0x188] sm:$0xff]
    %v974 = vld [vmem:[#allocation9 + $0x190] sm:$0xff]
    %v975 = vld [vmem:[#allocation9 + $0x198] sm:$0xff]
    %v976 = vld [vmem:[#allocation9 + $0x1a0] sm:$0xff]
    %v977 = vld [vmem:[#allocation9 + $0x1a8] sm:$0xff]
    %v978 = vld [vmem:[#allocation9 + $0x1b0] sm:$0xff]
    %v979 = vld [vmem:[#allocation9 + $0x1b8] sm:$0xff]
    %v980 = vld [vmem:[#allocation9 + $0x1c0] sm:$0xff]
    %v981 = vld [vmem:[#allocation9 + $0x1c8] sm:$0xff]
    %v982 = vld [vmem:[#allocation9 + $0x1d0] sm:$0xff]
    %v983 = vld [vmem:[#allocation9 + $0x1d8] sm:$0xff]
    %v984 = vld [vmem:[#allocation9 + $0x1e0] sm:$0xff]
    %v985 = vld [vmem:[#allocation9 + $0x1e8] sm:$0xff]
    %v986 = vld [vmem:[#allocation9 + $0x1f0] sm:$0xff]
    %v987 = vld [vmem:[#allocation9 + $0x1f8] sm:$0xff]
    %v988 = vld [vmem:[#allocation9 + $0x200] sm:$0xff]
    %v989 = vld [vmem:[#allocation9 + $0x208] sm:$0xff]
    %v990 = vld [vmem:[#allocation9 + $0x210] sm:$0xff]
    %v991 = vld [vmem:[#allocation9 + $0x218] sm:$0xff]
    %v992 = vld [vmem:[#allocation9 + $0x220] sm:$0xff]
    %v993 = vld [vmem:[#allocation9 + $0x228] sm:$0xff]
    %v994 = vld [vmem:[#allocation9 + $0x230] sm:$0xff]
    %v995 = vld [vmem:[#allocation9 + $0x238] sm:$0xff]
    %v996 = vld [vmem:[#allocation9 + $0x240] sm:$0xff]
    %v997 = vld [vmem:[#allocation9 + $0x248] sm:$0xff]
    %v998 = vld [vmem:[#allocation9 + $0x250] sm:$0xff]
    %v999 = vld [vmem:[#allocation9 + $0x258] sm:$0xff]
    %v1000 = vld [vmem:[#allocation9 + $0x260] sm:$0xff]
    %v1001 = vld [vmem:[#allocation9 + $0x268] sm:$0xff]
    %v1002 = vld [vmem:[#allocation9 + $0x270] sm:$0xff]
    %v1003 = vld [vmem:[#allocation9 + $0x278] sm:$0xff]
    %v1004 = vld [vmem:[#allocation9 + $0x280] sm:$0xff]
    %v1005 = vld [vmem:[#allocation9 + $0x288] sm:$0xff]
    %v1006 = vld [vmem:[#allocation9 + $0x290] sm:$0xff]
    %v1007 = vld [vmem:[#allocation9 + $0x298] sm:$0xff]
    %v1008 = vld [vmem:[#allocation9 + $0x2a0] sm:$0xff]
    %v1009 = vld [vmem:[#allocation9 + $0x2a8] sm:$0xff]
    %v1010 = vld [vmem:[#allocation9 + $0x2b0] sm:$0xff]
    %v1011 = vld [vmem:[#allocation9 + $0x2b8] sm:$0xff]
    %v1012 = vld [vmem:[#allocation9 + $0x2c0] sm:$0xff]
    %v1013 = vld [vmem:[#allocation9 + $0x2c8] sm:$0xff]
    %v1014 = vld [vmem:[#allocation9 + $0x2d0] sm:$0xff]
    %v1015 = vld [vmem:[#allocation9 + $0x2d8] sm:$0xff]
    %v1016 = vld [vmem:[#allocation9 + $0x2e0] sm:$0xff]
    %v1017 = vld [vmem:[#allocation9 + $0x2e8] sm:$0xff]
    %v1018 = vld [vmem:[#allocation9 + $0x2f0] sm:$0xff]
    %v1019 = vld [vmem:[#allocation9 + $0x2f8] sm:$0xff]
    %v1020 = vld [vmem:[#allocation9 + $0x300] sm:$0xff]
    %v1021 = vld [vmem:[#allocation9 + $0x308] sm:$0xff]
    %v1022 = vld [vmem:[#allocation9 + $0x310] sm:$0xff]
    %v1023 = vld [vmem:[#allocation9 + $0x318] sm:$0xff]
    %v1024 = vld [vmem:[#allocation9 + $0x320] sm:$0xff]
    %v1025 = vld [vmem:[#allocation9 + $0x328] sm:$0xff]
    %v1026 = vld [vmem:[#allocation9 + $0x330] sm:$0xff]
    %v1027 = vld [vmem:[#allocation9 + $0x338] sm:$0xff]
    %v1028 = vld [vmem:[#allocation9 + $0x340] sm:$0xff]
    %v1029 = vld [vmem:[#allocation9 + $0x348] sm:$0xff]
    %v1030 = vld [vmem:[#allocation9 + $0x350] sm:$0xff]
    %v1031 = vld [vmem:[#allocation9 + $0x358] sm:$0xff]
    %v1032 = vld [vmem:[#allocation9 + $0x360] sm:$0xff]
    %v1033 = vld [vmem:[#allocation9 + $0x368] sm:$0xff]
    %v1034 = vld [vmem:[#allocation9 + $0x370] sm:$0xff]
    %v1035 = vld [vmem:[#allocation9 + $0x378] sm:$0xff]
    %v1036 = vld [vmem:[#allocation9 + $0x380] sm:$0xff]
    %v1037 = vld [vmem:[#allocation9 + $0x388] sm:$0xff]
    %v1038 = vld [vmem:[#allocation9 + $0x390] sm:$0xff]
    %v1039 = vld [vmem:[#allocation9 + $0x398] sm:$0xff]
    %v1040 = vld [vmem:[#allocation9 + $0x3a0] sm:$0xff]
    %v1041 = vld [vmem:[#allocation9 + $0x3a8] sm:$0xff]
    %v1042 = vld [vmem:[#allocation9 + $0x3b0] sm:$0xff]
    %v1043 = vld [vmem:[#allocation9 + $0x3b8] sm:$0xff]
    %v1044 = vld [vmem:[#allocation9 + $0x3c0] sm:$0xff]
    %v1045 = vld [vmem:[#allocation9 + $0x3c8] sm:$0xff]
    %v1046 = vld [vmem:[#allocation9 + $0x3d0] sm:$0xff]
    %v1047 = vld [vmem:[#allocation9 + $0x3d8] sm:$0xff]
    %v1048 = vld [vmem:[#allocation9 + $0x3e0] sm:$0xff]
    %v1049 = vld [vmem:[#allocation9 + $0x3e8] sm:$0xff]
    %v1050 = vld [vmem:[#allocation9 + $0x3f0] sm:$0xff]
    %v1051 = vld [vmem:[#allocation9 + $0x3f8] sm:$0xff]
    %v1052 = vld [vmem:[#allocation9 + $0x400] sm:$0xff]
    %v1053 = vld [vmem:[#allocation9 + $0x408] sm:$0xff]
    %v1054 = vld [vmem:[#allocation9 + $0x410] sm:$0xff]
    %v1055 = vld [vmem:[#allocation9 + $0x418] sm:$0xff]
    %v1056 = vld [vmem:[#allocation9 + $0x420] sm:$0xff]
    %v1057 = vld [vmem:[#allocation9 + $0x428] sm:$0xff]
    %v1058 = vld [vmem:[#allocation9 + $0x430] sm:$0xff]
    %v1059 = vld [vmem:[#allocation9 + $0x438] sm:$0xff]
    %v1060 = vld [vmem:[#allocation9 + $0x440] sm:$0xff]
    %v1061 = vld [vmem:[#allocation9 + $0x448] sm:$0xff]
    %v1062 = vld [vmem:[#allocation9 + $0x450] sm:$0xff]
    %v1063 = vld [vmem:[#allocation9 + $0x458] sm:$0xff]
    %v1064 = vld [vmem:[#allocation9 + $0x460] sm:$0xff]
    %v1065 = vld [vmem:[#allocation9 + $0x468] sm:$0xff]
    %v1066 = vld [vmem:[#allocation9 + $0x470] sm:$0xff]
    %v1067 = vld [vmem:[#allocation9 + $0x478] sm:$0xff]
    %v1068 = vld [vmem:[#allocation9 + $0x480] sm:$0xff]
    %v1069 = vld [vmem:[#allocation9 + $0x488] sm:$0xff]
    %v1070 = vld [vmem:[#allocation9 + $0x490] sm:$0xff]
    %v1071 = vld [vmem:[#allocation9 + $0x498] sm:$0xff]
    %v1072 = vld [vmem:[#allocation9 + $0x4a0] sm:$0xff]
    %v1073 = vld [vmem:[#allocation9 + $0x4a8] sm:$0xff]
    %v1074 = vld [vmem:[#allocation9 + $0x4b0] sm:$0xff]
    %v1075 = vld [vmem:[#allocation9 + $0x4b8] sm:$0xff]
    %v1076 = vld [vmem:[#allocation9 + $0x4c0] sm:$0xff]
    %v1077 = vld [vmem:[#allocation9 + $0x4c8] sm:$0xff]
    %v1078 = vld [vmem:[#allocation9 + $0x4d0] sm:$0xff]
    %v1079 = vld [vmem:[#allocation9 + $0x4d8] sm:$0xff]
    %v1080 = vld [vmem:[#allocation9 + $0x4e0] sm:$0xff]
    %v1081 = vld [vmem:[#allocation9 + $0x4e8] sm:$0xff]
    %v1082 = vld [vmem:[#allocation9 + $0x4f0] sm:$0xff]
    %v1083 = vld [vmem:[#allocation9 + $0x4f8] sm:$0xff]
    %v1084 = vld [vmem:[#allocation9 + $0x500] sm:$0xff]
    %v1085 = vld [vmem:[#allocation9 + $0x508] sm:$0xff]
    %v1086 = vld [vmem:[#allocation9 + $0x510] sm:$0xff]
    %v1087 = vld [vmem:[#allocation9 + $0x518] sm:$0xff]
    %v1088 = vld [vmem:[#allocation9 + $0x520] sm:$0xff]
    %v1089 = vld [vmem:[#allocation9 + $0x528] sm:$0xff]
    %v1090 = vld [vmem:[#allocation9 + $0x530] sm:$0xff]
    %v1091 = vld [vmem:[#allocation9 + $0x538] sm:$0xff]
    %v1092 = vld [vmem:[#allocation9 + $0x540] sm:$0xff]
    %v1093 = vld [vmem:[#allocation9 + $0x548] sm:$0xff]
    %v1094 = vld [vmem:[#allocation9 + $0x550] sm:$0xff]
    %v1095 = vld [vmem:[#allocation9 + $0x558] sm:$0xff]
    %v1096 = vld [vmem:[#allocation9 + $0x560] sm:$0xff]
    %v1097 = vld [vmem:[#allocation9 + $0x568] sm:$0xff]
    %v1098 = vld [vmem:[#allocation9 + $0x570] sm:$0xff]
    %v1099 = vld [vmem:[#allocation9 + $0x578] sm:$0xff]
    %v1100 = vld [vmem:[#allocation9 + $0x580] sm:$0xff]
    %v1101 = vld [vmem:[#allocation9 + $0x588] sm:$0xff]
    %v1102 = vld [vmem:[#allocation9 + $0x590] sm:$0xff]
    %v1103 = vld [vmem:[#allocation9 + $0x598] sm:$0xff]
    %v1104 = vld [vmem:[#allocation9 + $0x5a0] sm:$0xff]
    %v1105 = vld [vmem:[#allocation9 + $0x5a8] sm:$0xff]
    %v1106 = vld [vmem:[#allocation9 + $0x5b0] sm:$0xff]
    %v1107 = vld [vmem:[#allocation9 + $0x5b8] sm:$0xff]
    %v1108 = vld [vmem:[#allocation9 + $0x5c0] sm:$0xff]
    %v1109 = vld [vmem:[#allocation9 + $0x5c8] sm:$0xff]
    %v1110 = vld [vmem:[#allocation9 + $0x5d0] sm:$0xff]
    %v1111 = vld [vmem:[#allocation9 + $0x5d8] sm:$0xff]
    %v1112 = vld [vmem:[#allocation9 + $0x5e0] sm:$0xff]
    %v1113 = vld [vmem:[#allocation9 + $0x5e8] sm:$0xff]
    %v1114 = vld [vmem:[#allocation9 + $0x5f0] sm:$0xff]
    %v1115 = vld [vmem:[#allocation9 + $0x5f8] sm:$0xff]
    %v1116 = vld [vmem:[#allocation9 + $0x600] sm:$0xff]
    %v1117 = vld [vmem:[#allocation9 + $0x608] sm:$0xff]
    %v1118 = vld [vmem:[#allocation9 + $0x610] sm:$0xff]
    %v1119 = vld [vmem:[#allocation9 + $0x618] sm:$0xff]
    %v1120 = vld [vmem:[#allocation9 + $0x620] sm:$0xff]
    %v1121 = vld [vmem:[#allocation9 + $0x628] sm:$0xff]
    %v1122 = vld [vmem:[#allocation9 + $0x630] sm:$0xff]
    %v1123 = vld [vmem:[#allocation9 + $0x638] sm:$0xff]
    %v1124 = vld [vmem:[#allocation9 + $0x640] sm:$0xff]
    %v1125 = vld [vmem:[#allocation9 + $0x648] sm:$0xff]
    %v1126 = vld [vmem:[#allocation9 + $0x650] sm:$0xff]
    %v1127 = vld [vmem:[#allocation9 + $0x658] sm:$0xff]
    %v1128 = vld [vmem:[#allocation9 + $0x660] sm:$0xff]
    %v1129 = vld [vmem:[#allocation9 + $0x668] sm:$0xff]
    %v1130 = vld [vmem:[#allocation9 + $0x670] sm:$0xff]
    %v1131 = vld [vmem:[#allocation9 + $0x678] sm:$0xff]
    %v1132 = vld [vmem:[#allocation9 + $0x680] sm:$0xff]
    %v1133 = vld [vmem:[#allocation9 + $0x688] sm:$0xff]
    %v1134 = vld [vmem:[#allocation9 + $0x690] sm:$0xff]
    %v1135 = vld [vmem:[#allocation9 + $0x698] sm:$0xff]
    %v1136 = vld [vmem:[#allocation9 + $0x6a0] sm:$0xff]
    %v1137 = vld [vmem:[#allocation9 + $0x6a8] sm:$0xff]
    %v1138 = vld [vmem:[#allocation9 + $0x6b0] sm:$0xff]
    %v1139 = vld [vmem:[#allocation9 + $0x6b8] sm:$0xff]
    %v1140 = vld [vmem:[#allocation9 + $0x6c0] sm:$0xff]
    %v1141 = vld [vmem:[#allocation9 + $0x6c8] sm:$0xff]
    %v1142 = vld [vmem:[#allocation9 + $0x6d0] sm:$0xff]
    %v1143 = vld [vmem:[#allocation9 + $0x6d8] sm:$0xff]
    %v1144 = vld [vmem:[#allocation9 + $0x6e0] sm:$0xff]
    %v1145 = vld [vmem:[#allocation9 + $0x6e8] sm:$0xff]
    %v1146 = vld [vmem:[#allocation9 + $0x6f0] sm:$0xff]
    %v1147 = vld [vmem:[#allocation9 + $0x6f8] sm:$0xff]
    %v1148 = vld [vmem:[#allocation9 + $0x700] sm:$0xff]
    %v1149 = vld [vmem:[#allocation9 + $0x708] sm:$0xff]
    %v1150 = vld [vmem:[#allocation9 + $0x710] sm:$0xff]
    %v1151 = vld [vmem:[#allocation9 + $0x718] sm:$0xff]
    %v1152 = vld [vmem:[#allocation9 + $0x720] sm:$0xff]
    %v1153 = vld [vmem:[#allocation9 + $0x728] sm:$0xff]
    %v1154 = vld [vmem:[#allocation9 + $0x730] sm:$0xff]
    %v1155 = vld [vmem:[#allocation9 + $0x738] sm:$0xff]
    %v1156 = vld [vmem:[#allocation9 + $0x740] sm:$0xff]
    %v1157 = vld [vmem:[#allocation9 + $0x748] sm:$0xff]
    %v1158 = vld [vmem:[#allocation9 + $0x750] sm:$0xff]
    %v1159 = vld [vmem:[#allocation9 + $0x758] sm:$0xff]
    %v1160 = vld [vmem:[#allocation9 + $0x760] sm:$0xff]
    %v1161 = vld [vmem:[#allocation9 + $0x768] sm:$0xff]
    %v1162 = vld [vmem:[#allocation9 + $0x770] sm:$0xff]
    %v1163 = vld [vmem:[#allocation9 + $0x778] sm:$0xff]
    %v1164 = vld [vmem:[#allocation9 + $0x780] sm:$0xff]
    %v1165 = vld [vmem:[#allocation9 + $0x788] sm:$0xff]
    %v1166 = vld [vmem:[#allocation9 + $0x790] sm:$0xff]
    %v1167 = vld [vmem:[#allocation9 + $0x798] sm:$0xff]
    %v1168 = vld [vmem:[#allocation9 + $0x7a0] sm:$0xff]
    %v1169 = vld [vmem:[#allocation9 + $0x7a8] sm:$0xff]
    %v1170 = vld [vmem:[#allocation9 + $0x7b0] sm:$0xff]
    %v1171 = vld [vmem:[#allocation9 + $0x7b8] sm:$0xff]
    %v1172 = vld [vmem:[#allocation9 + $0x7c0] sm:$0xff]
    %v1173 = vld [vmem:[#allocation9 + $0x7c8] sm:$0xff]
    %v1174 = vld [vmem:[#allocation9 + $0x7d0] sm:$0xff]
    %v1175 = vld [vmem:[#allocation9 + $0x7d8] sm:$0xff]
    %v1176 = vld [vmem:[#allocation9 + $0x7e0] sm:$0xff]
    %v1177 = vld [vmem:[#allocation9 + $0x7e8] sm:$0xff]
    %v1178 = vld [vmem:[#allocation9 + $0x7f0] sm:$0xff]
    %v1179 = vld [vmem:[#allocation9 + $0x7f8] sm:$0xff]
    %v1436 = vunpack.c.l.b16 %v924
    %v1437 = vunpack.c.h.b16 %v924
    %v1438 = vunpack.c.l.b16 %v925
    %v1439 = vunpack.c.h.b16 %v925
    %v1440 = vunpack.c.l.b16 %v926
    %v1441 = vunpack.c.h.b16 %v926
    %v1442 = vunpack.c.l.b16 %v927
    %v1443 = vunpack.c.h.b16 %v927
    %v1444 = vunpack.c.l.b16 %v928
    %v1445 = vunpack.c.h.b16 %v928
    %v1446 = vunpack.c.l.b16 %v929
    %v1447 = vunpack.c.h.b16 %v929
    %v1448 = vunpack.c.l.b16 %v930
    %v1449 = vunpack.c.h.b16 %v930
    %v1450 = vunpack.c.l.b16 %v931
    %v1451 = vunpack.c.h.b16 %v931
    %v1452 = vunpack.c.l.b16 %v932
    %v1453 = vunpack.c.h.b16 %v932
    %v1454 = vunpack.c.l.b16 %v933
    %v1455 = vunpack.c.h.b16 %v933
    %v1456 = vunpack.c.l.b16 %v934
    %v1457 = vunpack.c.h.b16 %v934
    %v1458 = vunpack.c.l.b16 %v935
    %v1459 = vunpack.c.h.b16 %v935
    %v1460 = vunpack.c.l.b16 %v936
    %v1461 = vunpack.c.h.b16 %v936
    %v1462 = vunpack.c.l.b16 %v937
    %v1463 = vunpack.c.h.b16 %v937
    %v1464 = vunpack.c.l.b16 %v938
    %v1465 = vunpack.c.h.b16 %v938
    %v1466 = vunpack.c.l.b16 %v939
    %v1467 = vunpack.c.h.b16 %v939
    %v1468 = vunpack.c.l.b16 %v940
    %v1469 = vunpack.c.h.b16 %v940
    %v1470 = vunpack.c.l.b16 %v941
    %v1471 = vunpack.c.h.b16 %v941
    %v1472 = vunpack.c.l.b16 %v942
    %v1473 = vunpack.c.h.b16 %v942
    %v1474 = vunpack.c.l.b16 %v943
    %v1475 = vunpack.c.h.b16 %v943
    %v1476 = vunpack.c.l.b16 %v944
    %v1477 = vunpack.c.h.b16 %v944
    %v1478 = vunpack.c.l.b16 %v945
    %v1479 = vunpack.c.h.b16 %v945
    %v1480 = vunpack.c.l.b16 %v946
    %v1481 = vunpack.c.h.b16 %v946
    %v1482 = vunpack.c.l.b16 %v947
    %v1483 = vunpack.c.h.b16 %v947
    %v1484 = vunpack.c.l.b16 %v948
    %v1485 = vunpack.c.h.b16 %v948
    %v1486 = vunpack.c.l.b16 %v949
    %v1487 = vunpack.c.h.b16 %v949
    %v1488 = vunpack.c.l.b16 %v950
    %v1489 = vunpack.c.h.b16 %v950
    %v1490 = vunpack.c.l.b16 %v951
    %v1491 = vunpack.c.h.b16 %v951
    %v1492 = vunpack.c.l.b16 %v952
    %v1493 = vunpack.c.h.b16 %v952
    %v1494 = vunpack.c.l.b16 %v953
    %v1495 = vunpack.c.h.b16 %v953
    %v1496 = vunpack.c.l.b16 %v954
    %v1497 = vunpack.c.h.b16 %v954
    %v1498 = vunpack.c.l.b16 %v955
    %v1499 = vunpack.c.h.b16 %v955
    %v1500 = vunpack.c.l.b16 %v956
    %v1501 = vunpack.c.h.b16 %v956
    %v1502 = vunpack.c.l.b16 %v957
    %v1503 = vunpack.c.h.b16 %v957
    %v1504 = vunpack.c.l.b16 %v958
    %v1505 = vunpack.c.h.b16 %v958
    %v1506 = vunpack.c.l.b16 %v959
    %v1507 = vunpack.c.h.b16 %v959
    %v1508 = vunpack.c.l.b16 %v960
    %v1509 = vunpack.c.h.b16 %v960
    %v1510 = vunpack.c.l.b16 %v961
    %v1511 = vunpack.c.h.b16 %v961
    %v1512 = vunpack.c.l.b16 %v962
    %v1513 = vunpack.c.h.b16 %v962
    %v1514 = vunpack.c.l.b16 %v963
    %v1515 = vunpack.c.h.b16 %v963
    %v1516 = vunpack.c.l.b16 %v964
    %v1517 = vunpack.c.h.b16 %v964
    %v1518 = vunpack.c.l.b16 %v965
    %v1519 = vunpack.c.h.b16 %v965
    %v1520 = vunpack.c.l.b16 %v966
    %v1521 = vunpack.c.h.b16 %v966
    %v1522 = vunpack.c.l.b16 %v967
    %v1523 = vunpack.c.h.b16 %v967
    %v1524 = vunpack.c.l.b16 %v968
    %v1525 = vunpack.c.h.b16 %v968
    %v1526 = vunpack.c.l.b16 %v969
    %v1527 = vunpack.c.h.b16 %v969
    %v1528 = vunpack.c.l.b16 %v970
    %v1529 = vunpack.c.h.b16 %v970
    %v1530 = vunpack.c.l.b16 %v971
    %v1531 = vunpack.c.h.b16 %v971
    %v1532 = vunpack.c.l.b16 %v972
    %v1533 = vunpack.c.h.b16 %v972
    %v1534 = vunpack.c.l.b16 %v973
    %v1535 = vunpack.c.h.b16 %v973
    %v1536 = vunpack.c.l.b16 %v974
    %v1537 = vunpack.c.h.b16 %v974
    %v1538 = vunpack.c.l.b16 %v975
    %v1539 = vunpack.c.h.b16 %v975
    %v1540 = vunpack.c.l.b16 %v976
    %v1541 = vunpack.c.h.b16 %v976
    %v1542 = vunpack.c.l.b16 %v977
    %v1543 = vunpack.c.h.b16 %v977
    %v1544 = vunpack.c.l.b16 %v978
    %v1545 = vunpack.c.h.b16 %v978
    %v1546 = vunpack.c.l.b16 %v979
    %v1547 = vunpack.c.h.b16 %v979
    %v1548 = vunpack.c.l.b16 %v980
    %v1549 = vunpack.c.h.b16 %v980
    %v1550 = vunpack.c.l.b16 %v981
    %v1551 = vunpack.c.h.b16 %v981
    %v1552 = vunpack.c.l.b16 %v982
    %v1553 = vunpack.c.h.b16 %v982
    %v1554 = vunpack.c.l.b16 %v983
    %v1555 = vunpack.c.h.b16 %v983
    %v1556 = vunpack.c.l.b16 %v984
    %v1557 = vunpack.c.h.b16 %v984
    %v1558 = vunpack.c.l.b16 %v985
    %v1559 = vunpack.c.h.b16 %v985
    %v1560 = vunpack.c.l.b16 %v986
    %v1561 = vunpack.c.h.b16 %v986
    %v1562 = vunpack.c.l.b16 %v987
    %v1563 = vunpack.c.h.b16 %v987
    %v1564 = vunpack.c.l.b16 %v988
    %v1565 = vunpack.c.h.b16 %v988
    %v1566 = vunpack.c.l.b16 %v989
    %v1567 = vunpack.c.h.b16 %v989
    %v1568 = vunpack.c.l.b16 %v990
    %v1569 = vunpack.c.h.b16 %v990
    %v1570 = vunpack.c.l.b16 %v991
    %v1571 = vunpack.c.h.b16 %v991
    %v1572 = vunpack.c.l.b16 %v992
    %v1573 = vunpack.c.h.b16 %v992
    %v1574 = vunpack.c.l.b16 %v993
    %v1575 = vunpack.c.h.b16 %v993
    %v1576 = vunpack.c.l.b16 %v994
    %v1577 = vunpack.c.h.b16 %v994
    %v1578 = vunpack.c.l.b16 %v995
    %v1579 = vunpack.c.h.b16 %v995
    %v1580 = vunpack.c.l.b16 %v996
    %v1581 = vunpack.c.h.b16 %v996
    %v1582 = vunpack.c.l.b16 %v997
    %v1583 = vunpack.c.h.b16 %v997
    %v1584 = vunpack.c.l.b16 %v998
    %v1585 = vunpack.c.h.b16 %v998
    %v1586 = vunpack.c.l.b16 %v999
    %v1587 = vunpack.c.h.b16 %v999
    %v1588 = vunpack.c.l.b16 %v1000
    %v1589 = vunpack.c.h.b16 %v1000
    %v1590 = vunpack.c.l.b16 %v1001
    %v1591 = vunpack.c.h.b16 %v1001
    %v1592 = vunpack.c.l.b16 %v1002
    %v1593 = vunpack.c.h.b16 %v1002
    %v1594 = vunpack.c.l.b16 %v1003
    %v1595 = vunpack.c.h.b16 %v1003
    %v1596 = vunpack.c.l.b16 %v1004
    %v1597 = vunpack.c.h.b16 %v1004
    %v1598 = vunpack.c.l.b16 %v1005
    %v1599 = vunpack.c.h.b16 %v1005
    %v1600 = vunpack.c.l.b16 %v1006
    %v1601 = vunpack.c.h.b16 %v1006
    %v1602 = vunpack.c.l.b16 %v1007
    %v1603 = vunpack.c.h.b16 %v1007
    %v1604 = vunpack.c.l.b16 %v1008
    %v1605 = vunpack.c.h.b16 %v1008
    %v1606 = vunpack.c.l.b16 %v1009
    %v1607 = vunpack.c.h.b16 %v1009
    %v1608 = vunpack.c.l.b16 %v1010
    %v1609 = vunpack.c.h.b16 %v1010
    %v1610 = vunpack.c.l.b16 %v1011
    %v1611 = vunpack.c.h.b16 %v1011
    %v1612 = vunpack.c.l.b16 %v1012
    %v1613 = vunpack.c.h.b16 %v1012
    %v1614 = vunpack.c.l.b16 %v1013
    %v1615 = vunpack.c.h.b16 %v1013
    %v1616 = vunpack.c.l.b16 %v1014
    %v1617 = vunpack.c.h.b16 %v1014
    %v1618 = vunpack.c.l.b16 %v1015
    %v1619 = vunpack.c.h.b16 %v1015
    %v1620 = vunpack.c.l.b16 %v1016
    %v1621 = vunpack.c.h.b16 %v1016
    %v1622 = vunpack.c.l.b16 %v1017
    %v1623 = vunpack.c.h.b16 %v1017
    %v1624 = vunpack.c.l.b16 %v1018
    %v1625 = vunpack.c.h.b16 %v1018
    %v1626 = vunpack.c.l.b16 %v1019
    %v1627 = vunpack.c.h.b16 %v1019
    %v1628 = vunpack.c.l.b16 %v1020
    %v1629 = vunpack.c.h.b16 %v1020
    %v1630 = vunpack.c.l.b16 %v1021
    %v1631 = vunpack.c.h.b16 %v1021
    %v1632 = vunpack.c.l.b16 %v1022
    %v1633 = vunpack.c.h.b16 %v1022
    %v1634 = vunpack.c.l.b16 %v1023
    %v1635 = vunpack.c.h.b16 %v1023
    %v1636 = vunpack.c.l.b16 %v1024
    %v1637 = vunpack.c.h.b16 %v1024
    %v1638 = vunpack.c.l.b16 %v1025
    %v1639 = vunpack.c.h.b16 %v1025
    %v1640 = vunpack.c.l.b16 %v1026
    %v1641 = vunpack.c.h.b16 %v1026
    %v1642 = vunpack.c.l.b16 %v1027
    %v1643 = vunpack.c.h.b16 %v1027
    %v1644 = vunpack.c.l.b16 %v1028
    %v1645 = vunpack.c.h.b16 %v1028
    %v1646 = vunpack.c.l.b16 %v1029
    %v1647 = vunpack.c.h.b16 %v1029
    %v1648 = vunpack.c.l.b16 %v1030
    %v1649 = vunpack.c.h.b16 %v1030
    %v1650 = vunpack.c.l.b16 %v1031
    %v1651 = vunpack.c.h.b16 %v1031
    %v1652 = vunpack.c.l.b16 %v1032
    %v1653 = vunpack.c.h.b16 %v1032
    %v1654 = vunpack.c.l.b16 %v1033
    %v1655 = vunpack.c.h.b16 %v1033
    %v1656 = vunpack.c.l.b16 %v1034
    %v1657 = vunpack.c.h.b16 %v1034
    %v1658 = vunpack.c.l.b16 %v1035
    %v1659 = vunpack.c.h.b16 %v1035
    %v1660 = vunpack.c.l.b16 %v1036
    %v1661 = vunpack.c.h.b16 %v1036
    %v1662 = vunpack.c.l.b16 %v1037
    %v1663 = vunpack.c.h.b16 %v1037
    %v1664 = vunpack.c.l.b16 %v1038
    %v1665 = vunpack.c.h.b16 %v1038
    %v1666 = vunpack.c.l.b16 %v1039
    %v1667 = vunpack.c.h.b16 %v1039
    %v1668 = vunpack.c.l.b16 %v1040
    %v1669 = vunpack.c.h.b16 %v1040
    %v1670 = vunpack.c.l.b16 %v1041
    %v1671 = vunpack.c.h.b16 %v1041
    %v1672 = vunpack.c.l.b16 %v1042
    %v1673 = vunpack.c.h.b16 %v1042
    %v1674 = vunpack.c.l.b16 %v1043
    %v1675 = vunpack.c.h.b16 %v1043
    %v1676 = vunpack.c.l.b16 %v1044
    %v1677 = vunpack.c.h.b16 %v1044
    %v1678 = vunpack.c.l.b16 %v1045
    %v1679 = vunpack.c.h.b16 %v1045
    %v1680 = vunpack.c.l.b16 %v1046
    %v1681 = vunpack.c.h.b16 %v1046
    %v1682 = vunpack.c.l.b16 %v1047
    %v1683 = vunpack.c.h.b16 %v1047
    %v1684 = vunpack.c.l.b16 %v1048
    %v1685 = vunpack.c.h.b16 %v1048
    %v1686 = vunpack.c.l.b16 %v1049
    %v1687 = vunpack.c.h.b16 %v1049
    %v1688 = vunpack.c.l.b16 %v1050
    %v1689 = vunpack.c.h.b16 %v1050
    %v1690 = vunpack.c.l.b16 %v1051
    %v1691 = vunpack.c.h.b16 %v1051
    %v1692 = vunpack.c.l.b16 %v1052
    %v1693 = vunpack.c.h.b16 %v1052
    %v1694 = vunpack.c.l.b16 %v1053
    %v1695 = vunpack.c.h.b16 %v1053
    %v1696 = vunpack.c.l.b16 %v1054
    %v1697 = vunpack.c.h.b16 %v1054
    %v1698 = vunpack.c.l.b16 %v1055
    %v1699 = vunpack.c.h.b16 %v1055
    %v1700 = vunpack.c.l.b16 %v1056
    %v1701 = vunpack.c.h.b16 %v1056
    %v1702 = vunpack.c.l.b16 %v1057
    %v1703 = vunpack.c.h.b16 %v1057
    %v1704 = vunpack.c.l.b16 %v1058
    %v1705 = vunpack.c.h.b16 %v1058
    %v1706 = vunpack.c.l.b16 %v1059
    %v1707 = vunpack.c.h.b16 %v1059
    %v1708 = vunpack.c.l.b16 %v1060
    %v1709 = vunpack.c.h.b16 %v1060
    %v1710 = vunpack.c.l.b16 %v1061
    %v1711 = vunpack.c.h.b16 %v1061
    %v1712 = vunpack.c.l.b16 %v1062
    %v1713 = vunpack.c.h.b16 %v1062
    %v1714 = vunpack.c.l.b16 %v1063
    %v1715 = vunpack.c.h.b16 %v1063
    %v1716 = vunpack.c.l.b16 %v1064
    %v1717 = vunpack.c.h.b16 %v1064
    %v1718 = vunpack.c.l.b16 %v1065
    %v1719 = vunpack.c.h.b16 %v1065
    %v1720 = vunpack.c.l.b16 %v1066
    %v1721 = vunpack.c.h.b16 %v1066
    %v1722 = vunpack.c.l.b16 %v1067
    %v1723 = vunpack.c.h.b16 %v1067
    %v1724 = vunpack.c.l.b16 %v1068
    %v1725 = vunpack.c.h.b16 %v1068
    %v1726 = vunpack.c.l.b16 %v1069
    %v1727 = vunpack.c.h.b16 %v1069
    %v1728 = vunpack.c.l.b16 %v1070
    %v1729 = vunpack.c.h.b16 %v1070
    %v1730 = vunpack.c.l.b16 %v1071
    %v1731 = vunpack.c.h.b16 %v1071
    %v1732 = vunpack.c.l.b16 %v1072
    %v1733 = vunpack.c.h.b16 %v1072
    %v1734 = vunpack.c.l.b16 %v1073
    %v1735 = vunpack.c.h.b16 %v1073
    %v1736 = vunpack.c.l.b16 %v1074
    %v1737 = vunpack.c.h.b16 %v1074
    %v1738 = vunpack.c.l.b16 %v1075
    %v1739 = vunpack.c.h.b16 %v1075
    %v1740 = vunpack.c.l.b16 %v1076
    %v1741 = vunpack.c.h.b16 %v1076
    %v1742 = vunpack.c.l.b16 %v1077
    %v1743 = vunpack.c.h.b16 %v1077
    %v1744 = vunpack.c.l.b16 %v1078
    %v1745 = vunpack.c.h.b16 %v1078
    %v1746 = vunpack.c.l.b16 %v1079
    %v1747 = vunpack.c.h.b16 %v1079
    %v1748 = vunpack.c.l.b16 %v1080
    %v1749 = vunpack.c.h.b16 %v1080
    %v1750 = vunpack.c.l.b16 %v1081
    %v1751 = vunpack.c.h.b16 %v1081
    %v1752 = vunpack.c.l.b16 %v1082
    %v1753 = vunpack.c.h.b16 %v1082
    %v1754 = vunpack.c.l.b16 %v1083
    %v1755 = vunpack.c.h.b16 %v1083
    %v1756 = vunpack.c.l.b16 %v1084
    %v1757 = vunpack.c.h.b16 %v1084
    %v1758 = vunpack.c.l.b16 %v1085
    %v1759 = vunpack.c.h.b16 %v1085
    %v1760 = vunpack.c.l.b16 %v1086
    %v1761 = vunpack.c.h.b16 %v1086
    %v1762 = vunpack.c.l.b16 %v1087
    %v1763 = vunpack.c.h.b16 %v1087
    %v1764 = vunpack.c.l.b16 %v1088
    %v1765 = vunpack.c.h.b16 %v1088
    %v1766 = vunpack.c.l.b16 %v1089
    %v1767 = vunpack.c.h.b16 %v1089
    %v1768 = vunpack.c.l.b16 %v1090
    %v1769 = vunpack.c.h.b16 %v1090
    %v1770 = vunpack.c.l.b16 %v1091
    %v1771 = vunpack.c.h.b16 %v1091
    %v1772 = vunpack.c.l.b16 %v1092
    %v1773 = vunpack.c.h.b16 %v1092
    %v1774 = vunpack.c.l.b16 %v1093
    %v1775 = vunpack.c.h.b16 %v1093
    %v1776 = vunpack.c.l.b16 %v1094
    %v1777 = vunpack.c.h.b16 %v1094
    %v1778 = vunpack.c.l.b16 %v1095
    %v1779 = vunpack.c.h.b16 %v1095
    %v1780 = vunpack.c.l.b16 %v1096
    %v1781 = vunpack.c.h.b16 %v1096
    %v1782 = vunpack.c.l.b16 %v1097
    %v1783 = vunpack.c.h.b16 %v1097
    %v1784 = vunpack.c.l.b16 %v1098
    %v1785 = vunpack.c.h.b16 %v1098
    %v1786 = vunpack.c.l.b16 %v1099
    %v1787 = vunpack.c.h.b16 %v1099
    %v1788 = vunpack.c.l.b16 %v1100
    %v1789 = vunpack.c.h.b16 %v1100
    %v1790 = vunpack.c.l.b16 %v1101
    %v1791 = vunpack.c.h.b16 %v1101
    %v1792 = vunpack.c.l.b16 %v1102
    %v1793 = vunpack.c.h.b16 %v1102
    %v1794 = vunpack.c.l.b16 %v1103
    %v1795 = vunpack.c.h.b16 %v1103
    %v1796 = vunpack.c.l.b16 %v1104
    %v1797 = vunpack.c.h.b16 %v1104
    %v1798 = vunpack.c.l.b16 %v1105
    %v1799 = vunpack.c.h.b16 %v1105
    %v1800 = vunpack.c.l.b16 %v1106
    %v1801 = vunpack.c.h.b16 %v1106
    %v1802 = vunpack.c.l.b16 %v1107
    %v1803 = vunpack.c.h.b16 %v1107
    %v1804 = vunpack.c.l.b16 %v1108
    %v1805 = vunpack.c.h.b16 %v1108
    %v1806 = vunpack.c.l.b16 %v1109
    %v1807 = vunpack.c.h.b16 %v1109
    %v1808 = vunpack.c.l.b16 %v1110
    %v1809 = vunpack.c.h.b16 %v1110
    %v1810 = vunpack.c.l.b16 %v1111
    %v1811 = vunpack.c.h.b16 %v1111
    %v1812 = vunpack.c.l.b16 %v1112
    %v1813 = vunpack.c.h.b16 %v1112
    %v1814 = vunpack.c.l.b16 %v1113
    %v1815 = vunpack.c.h.b16 %v1113
    %v1816 = vunpack.c.l.b16 %v1114
    %v1817 = vunpack.c.h.b16 %v1114
    %v1818 = vunpack.c.l.b16 %v1115
    %v1819 = vunpack.c.h.b16 %v1115
    %v1820 = vunpack.c.l.b16 %v1116
    %v1821 = vunpack.c.h.b16 %v1116
    %v1822 = vunpack.c.l.b16 %v1117
    %v1823 = vunpack.c.h.b16 %v1117
    %v1824 = vunpack.c.l.b16 %v1118
    %v1825 = vunpack.c.h.b16 %v1118
    %v1826 = vunpack.c.l.b16 %v1119
    %v1827 = vunpack.c.h.b16 %v1119
    %v1828 = vunpack.c.l.b16 %v1120
    %v1829 = vunpack.c.h.b16 %v1120
    %v1830 = vunpack.c.l.b16 %v1121
    %v1831 = vunpack.c.h.b16 %v1121
    %v1832 = vunpack.c.l.b16 %v1122
    %v1833 = vunpack.c.h.b16 %v1122
    %v1834 = vunpack.c.l.b16 %v1123
    %v1835 = vunpack.c.h.b16 %v1123
    %v1836 = vunpack.c.l.b16 %v1124
    %v1837 = vunpack.c.h.b16 %v1124
    %v1838 = vunpack.c.l.b16 %v1125
    %v1839 = vunpack.c.h.b16 %v1125
    %v1840 = vunpack.c.l.b16 %v1126
    %v1841 = vunpack.c.h.b16 %v1126
    %v1842 = vunpack.c.l.b16 %v1127
    %v1843 = vunpack.c.h.b16 %v1127
    %v1844 = vunpack.c.l.b16 %v1128
    %v1845 = vunpack.c.h.b16 %v1128
    %v1846 = vunpack.c.l.b16 %v1129
    %v1847 = vunpack.c.h.b16 %v1129
    %v1848 = vunpack.c.l.b16 %v1130
    %v1849 = vunpack.c.h.b16 %v1130
    %v1850 = vunpack.c.l.b16 %v1131
    %v1851 = vunpack.c.h.b16 %v1131
    %v1852 = vunpack.c.l.b16 %v1132
    %v1853 = vunpack.c.h.b16 %v1132
    %v1854 = vunpack.c.l.b16 %v1133
    %v1855 = vunpack.c.h.b16 %v1133
    %v1856 = vunpack.c.l.b16 %v1134
    %v1857 = vunpack.c.h.b16 %v1134
    %v1858 = vunpack.c.l.b16 %v1135
    %v1859 = vunpack.c.h.b16 %v1135
    %v1860 = vunpack.c.l.b16 %v1136
    %v1861 = vunpack.c.h.b16 %v1136
    %v1862 = vunpack.c.l.b16 %v1137
    %v1863 = vunpack.c.h.b16 %v1137
    %v1864 = vunpack.c.l.b16 %v1138
    %v1865 = vunpack.c.h.b16 %v1138
    %v1866 = vunpack.c.l.b16 %v1139
    %v1867 = vunpack.c.h.b16 %v1139
    %v1868 = vunpack.c.l.b16 %v1140
    %v1869 = vunpack.c.h.b16 %v1140
    %v1870 = vunpack.c.l.b16 %v1141
    %v1871 = vunpack.c.h.b16 %v1141
    %v1872 = vunpack.c.l.b16 %v1142
    %v1873 = vunpack.c.h.b16 %v1142
    %v1874 = vunpack.c.l.b16 %v1143
    %v1875 = vunpack.c.h.b16 %v1143
    %v1876 = vunpack.c.l.b16 %v1144
    %v1877 = vunpack.c.h.b16 %v1144
    %v1878 = vunpack.c.l.b16 %v1145
    %v1879 = vunpack.c.h.b16 %v1145
    %v1880 = vunpack.c.l.b16 %v1146
    %v1881 = vunpack.c.h.b16 %v1146
    %v1882 = vunpack.c.l.b16 %v1147
    %v1883 = vunpack.c.h.b16 %v1147
    %v1884 = vunpack.c.l.b16 %v1148
    %v1885 = vunpack.c.h.b16 %v1148
    %v1886 = vunpack.c.l.b16 %v1149
    %v1887 = vunpack.c.h.b16 %v1149
    %v1888 = vunpack.c.l.b16 %v1150
    %v1889 = vunpack.c.h.b16 %v1150
    %v1890 = vunpack.c.l.b16 %v1151
    %v1891 = vunpack.c.h.b16 %v1151
    %v1892 = vunpack.c.l.b16 %v1152
    %v1893 = vunpack.c.h.b16 %v1152
    %v1894 = vunpack.c.l.b16 %v1153
    %v1895 = vunpack.c.h.b16 %v1153
    %v1896 = vunpack.c.l.b16 %v1154
    %v1897 = vunpack.c.h.b16 %v1154
    %v1898 = vunpack.c.l.b16 %v1155
    %v1899 = vunpack.c.h.b16 %v1155
    %v1900 = vunpack.c.l.b16 %v1156
    %v1901 = vunpack.c.h.b16 %v1156
    %v1902 = vunpack.c.l.b16 %v1157
    %v1903 = vunpack.c.h.b16 %v1157
    %v1904 = vunpack.c.l.b16 %v1158
    %v1905 = vunpack.c.h.b16 %v1158
    %v1906 = vunpack.c.l.b16 %v1159
    %v1907 = vunpack.c.h.b16 %v1159
    %v1908 = vunpack.c.l.b16 %v1160
    %v1909 = vunpack.c.h.b16 %v1160
    %v1910 = vunpack.c.l.b16 %v1161
    %v1911 = vunpack.c.h.b16 %v1161
    %v1912 = vunpack.c.l.b16 %v1162
    %v1913 = vunpack.c.h.b16 %v1162
    %v1914 = vunpack.c.l.b16 %v1163
    %v1915 = vunpack.c.h.b16 %v1163
    %v1916 = vunpack.c.l.b16 %v1164
    %v1917 = vunpack.c.h.b16 %v1164
    %v1918 = vunpack.c.l.b16 %v1165
    %v1919 = vunpack.c.h.b16 %v1165
    %v1920 = vunpack.c.l.b16 %v1166
    %v1921 = vunpack.c.h.b16 %v1166
    %v1922 = vunpack.c.l.b16 %v1167
    %v1923 = vunpack.c.h.b16 %v1167
    %v1924 = vunpack.c.l.b16 %v1168
    %v1925 = vunpack.c.h.b16 %v1168
    %v1926 = vunpack.c.l.b16 %v1169
    %v1927 = vunpack.c.h.b16 %v1169
    %v1928 = vunpack.c.l.b16 %v1170
    %v1929 = vunpack.c.h.b16 %v1170
    %v1930 = vunpack.c.l.b16 %v1171
    %v1931 = vunpack.c.h.b16 %v1171
    %v1932 = vunpack.c.l.b16 %v1172
    %v1933 = vunpack.c.h.b16 %v1172
    %v1934 = vunpack.c.l.b16 %v1173
    %v1935 = vunpack.c.h.b16 %v1173
    %v1936 = vunpack.c.l.b16 %v1174
    %v1937 = vunpack.c.h.b16 %v1174
    %v1938 = vunpack.c.l.b16 %v1175
    %v1939 = vunpack.c.h.b16 %v1175
    %v1940 = vunpack.c.l.b16 %v1176
    %v1941 = vunpack.c.h.b16 %v1176
    %v1942 = vunpack.c.l.b16 %v1177
    %v1943 = vunpack.c.h.b16 %v1177
    %v1944 = vunpack.c.l.b16 %v1178
    %v1945 = vunpack.c.h.b16 %v1178
    %v1946 = vunpack.c.l.b16 %v1179
    %v1947 = vunpack.c.h.b16 %v1179
    %v1948 = vpack.c.b16 %v1440, %v1436
    %v1949 = vpack.c.b16 %v1441, %v1437
    %v1950 = vpack.c.b16 %v1442, %v1438
    %v1951 = vpack.c.b16 %v1443, %v1439
    %v1952 = vpack.c.b16 %v1448, %v1444
    %v1953 = vpack.c.b16 %v1449, %v1445
    %v1954 = vpack.c.b16 %v1450, %v1446
    %v1955 = vpack.c.b16 %v1451, %v1447
    %v1956 = vpack.c.b16 %v1456, %v1452
    %v1957 = vpack.c.b16 %v1457, %v1453
    %v1958 = vpack.c.b16 %v1458, %v1454
    %v1959 = vpack.c.b16 %v1459, %v1455
    %v1960 = vpack.c.b16 %v1464, %v1460
    %v1961 = vpack.c.b16 %v1465, %v1461
    %v1962 = vpack.c.b16 %v1466, %v1462
    %v1963 = vpack.c.b16 %v1467, %v1463
    %v1964 = vpack.c.b16 %v1472, %v1468
    %v1965 = vpack.c.b16 %v1473, %v1469
    %v1966 = vpack.c.b16 %v1474, %v1470
    %v1967 = vpack.c.b16 %v1475, %v1471
    %v1968 = vpack.c.b16 %v1480, %v1476
    %v1969 = vpack.c.b16 %v1481, %v1477
    %v1970 = vpack.c.b16 %v1482, %v1478
    %v1971 = vpack.c.b16 %v1483, %v1479
    %v1972 = vpack.c.b16 %v1488, %v1484
    %v1973 = vpack.c.b16 %v1489, %v1485
    %v1974 = vpack.c.b16 %v1490, %v1486
    %v1975 = vpack.c.b16 %v1491, %v1487
    %v1976 = vpack.c.b16 %v1496, %v1492
    %v1977 = vpack.c.b16 %v1497, %v1493
    %v1978 = vpack.c.b16 %v1498, %v1494
    %v1979 = vpack.c.b16 %v1499, %v1495
    %v1980 = vpack.c.b16 %v1504, %v1500
    %v1981 = vpack.c.b16 %v1505, %v1501
    %v1982 = vpack.c.b16 %v1506, %v1502
    %v1983 = vpack.c.b16 %v1507, %v1503
    %v1984 = vpack.c.b16 %v1512, %v1508
    %v1985 = vpack.c.b16 %v1513, %v1509
    %v1986 = vpack.c.b16 %v1514, %v1510
    %v1987 = vpack.c.b16 %v1515, %v1511
    %v1988 = vpack.c.b16 %v1520, %v1516
    %v1989 = vpack.c.b16 %v1521, %v1517
    %v1990 = vpack.c.b16 %v1522, %v1518
    %v1991 = vpack.c.b16 %v1523, %v1519
    %v1992 = vpack.c.b16 %v1528, %v1524
    %v1993 = vpack.c.b16 %v1529, %v1525
    %v1994 = vpack.c.b16 %v1530, %v1526
    %v1995 = vpack.c.b16 %v1531, %v1527
    %v1996 = vpack.c.b16 %v1536, %v1532
    %v1997 = vpack.c.b16 %v1537, %v1533
    %v1998 = vpack.c.b16 %v1538, %v1534
    %v1999 = vpack.c.b16 %v1539, %v1535
    %v2000 = vpack.c.b16 %v1544, %v1540
    %v2001 = vpack.c.b16 %v1545, %v1541
    %v2002 = vpack.c.b16 %v1546, %v1542
    %v2003 = vpack.c.b16 %v1547, %v1543
    %v2004 = vpack.c.b16 %v1552, %v1548
    %v2005 = vpack.c.b16 %v1553, %v1549
    %v2006 = vpack.c.b16 %v1554, %v1550
    %v2007 = vpack.c.b16 %v1555, %v1551
    %v2008 = vpack.c.b16 %v1560, %v1556
    %v2009 = vpack.c.b16 %v1561, %v1557
    %v2010 = vpack.c.b16 %v1562, %v1558
    %v2011 = vpack.c.b16 %v1563, %v1559
    %v2012 = vpack.c.b16 %v1568, %v1564
    %v2013 = vpack.c.b16 %v1569, %v1565
    %v2014 = vpack.c.b16 %v1570, %v1566
    %v2015 = vpack.c.b16 %v1571, %v1567
    %v2016 = vpack.c.b16 %v1576, %v1572
    %v2017 = vpack.c.b16 %v1577, %v1573
    %v2018 = vpack.c.b16 %v1578, %v1574
    %v2019 = vpack.c.b16 %v1579, %v1575
    %v2020 = vpack.c.b16 %v1584, %v1580
    %v2021 = vpack.c.b16 %v1585, %v1581
    %v2022 = vpack.c.b16 %v1586, %v1582
    %v2023 = vpack.c.b16 %v1587, %v1583
    %v2024 = vpack.c.b16 %v1592, %v1588
    %v2025 = vpack.c.b16 %v1593, %v1589
    %v2026 = vpack.c.b16 %v1594, %v1590
    %v2027 = vpack.c.b16 %v1595, %v1591
    %v2028 = vpack.c.b16 %v1600, %v1596
    %v2029 = vpack.c.b16 %v1601, %v1597
    %v2030 = vpack.c.b16 %v1602, %v1598
    %v2031 = vpack.c.b16 %v1603, %v1599
    %v2032 = vpack.c.b16 %v1608, %v1604
    %v2033 = vpack.c.b16 %v1609, %v1605
    %v2034 = vpack.c.b16 %v1610, %v1606
    %v2035 = vpack.c.b16 %v1611, %v1607
    %v2036 = vpack.c.b16 %v1616, %v1612
    %v2037 = vpack.c.b16 %v1617, %v1613
    %v2038 = vpack.c.b16 %v1618, %v1614
    %v2039 = vpack.c.b16 %v1619, %v1615
    %v2040 = vpack.c.b16 %v1624, %v1620
    %v2041 = vpack.c.b16 %v1625, %v1621
    %v2042 = vpack.c.b16 %v1626, %v1622
    %v2043 = vpack.c.b16 %v1627, %v1623
    %v2044 = vpack.c.b16 %v1632, %v1628
    %v2045 = vpack.c.b16 %v1633, %v1629
    %v2046 = vpack.c.b16 %v1634, %v1630
    %v2047 = vpack.c.b16 %v1635, %v1631
    %v2048 = vpack.c.b16 %v1640, %v1636
    %v2049 = vpack.c.b16 %v1641, %v1637
    %v2050 = vpack.c.b16 %v1642, %v1638
    %v2051 = vpack.c.b16 %v1643, %v1639
    %v2052 = vpack.c.b16 %v1648, %v1644
    %v2053 = vpack.c.b16 %v1649, %v1645
    %v2054 = vpack.c.b16 %v1650, %v1646
    %v2055 = vpack.c.b16 %v1651, %v1647
    %v2056 = vpack.c.b16 %v1656, %v1652
    %v2057 = vpack.c.b16 %v1657, %v1653
    %v2058 = vpack.c.b16 %v1658, %v1654
    %v2059 = vpack.c.b16 %v1659, %v1655
    %v2060 = vpack.c.b16 %v1664, %v1660
    %v2061 = vpack.c.b16 %v1665, %v1661
    %v2062 = vpack.c.b16 %v1666, %v1662
    %v2063 = vpack.c.b16 %v1667, %v1663
    %v2064 = vpack.c.b16 %v1672, %v1668
    %v2065 = vpack.c.b16 %v1673, %v1669
    %v2066 = vpack.c.b16 %v1674, %v1670
    %v2067 = vpack.c.b16 %v1675, %v1671
    %v2068 = vpack.c.b16 %v1680, %v1676
    %v2069 = vpack.c.b16 %v1681, %v1677
    %v2070 = vpack.c.b16 %v1682, %v1678
    %v2071 = vpack.c.b16 %v1683, %v1679
    %v2072 = vpack.c.b16 %v1688, %v1684
    %v2073 = vpack.c.b16 %v1689, %v1685
    %v2074 = vpack.c.b16 %v1690, %v1686
    %v2075 = vpack.c.b16 %v1691, %v1687
    %v2076 = vpack.c.b16 %v1696, %v1692
    %v2077 = vpack.c.b16 %v1697, %v1693
    %v2078 = vpack.c.b16 %v1698, %v1694
    %v2079 = vpack.c.b16 %v1699, %v1695
    %v2080 = vpack.c.b16 %v1704, %v1700
    %v2081 = vpack.c.b16 %v1705, %v1701
    %v2082 = vpack.c.b16 %v1706, %v1702
    %v2083 = vpack.c.b16 %v1707, %v1703
    %v2084 = vpack.c.b16 %v1712, %v1708
    %v2085 = vpack.c.b16 %v1713, %v1709
    %v2086 = vpack.c.b16 %v1714, %v1710
    %v2087 = vpack.c.b16 %v1715, %v1711
    %v2088 = vpack.c.b16 %v1720, %v1716
    %v2089 = vpack.c.b16 %v1721, %v1717
    %v2090 = vpack.c.b16 %v1722, %v1718
    %v2091 = vpack.c.b16 %v1723, %v1719
    %v2092 = vpack.c.b16 %v1728, %v1724
    %v2093 = vpack.c.b16 %v1729, %v1725
    %v2094 = vpack.c.b16 %v1730, %v1726
    %v2095 = vpack.c.b16 %v1731, %v1727
    %v2096 = vpack.c.b16 %v1736, %v1732
    %v2097 = vpack.c.b16 %v1737, %v1733
    %v2098 = vpack.c.b16 %v1738, %v1734
    %v2099 = vpack.c.b16 %v1739, %v1735
    %v2100 = vpack.c.b16 %v1744, %v1740
    %v2101 = vpack.c.b16 %v1745, %v1741
    %v2102 = vpack.c.b16 %v1746, %v1742
    %v2103 = vpack.c.b16 %v1747, %v1743
    %v2104 = vpack.c.b16 %v1752, %v1748
    %v2105 = vpack.c.b16 %v1753, %v1749
    %v2106 = vpack.c.b16 %v1754, %v1750
    %v2107 = vpack.c.b16 %v1755, %v1751
    %v2108 = vpack.c.b16 %v1760, %v1756
    %v2109 = vpack.c.b16 %v1761, %v1757
    %v2110 = vpack.c.b16 %v1762, %v1758
    %v2111 = vpack.c.b16 %v1763, %v1759
    %v2112 = vpack.c.b16 %v1768, %v1764
    %v2113 = vpack.c.b16 %v1769, %v1765
    %v2114 = vpack.c.b16 %v1770, %v1766
    %v2115 = vpack.c.b16 %v1771, %v1767
    %v2116 = vpack.c.b16 %v1776, %v1772
    %v2117 = vpack.c.b16 %v1777, %v1773
    %v2118 = vpack.c.b16 %v1778, %v1774
    %v2119 = vpack.c.b16 %v1779, %v1775
    %v2120 = vpack.c.b16 %v1784, %v1780
    %v2121 = vpack.c.b16 %v1785, %v1781
    %v2122 = vpack.c.b16 %v1786, %v1782
    %v2123 = vpack.c.b16 %v1787, %v1783
    %v2124 = vpack.c.b16 %v1792, %v1788
    %v2125 = vpack.c.b16 %v1793, %v1789
    %v2126 = vpack.c.b16 %v1794, %v1790
    %v2127 = vpack.c.b16 %v1795, %v1791
    %v2128 = vpack.c.b16 %v1800, %v1796
    %v2129 = vpack.c.b16 %v1801, %v1797
    %v2130 = vpack.c.b16 %v1802, %v1798
    %v2131 = vpack.c.b16 %v1803, %v1799
    %v2132 = vpack.c.b16 %v1808, %v1804
    %v2133 = vpack.c.b16 %v1809, %v1805
    %v2134 = vpack.c.b16 %v1810, %v1806
    %v2135 = vpack.c.b16 %v1811, %v1807
    %v2136 = vpack.c.b16 %v1816, %v1812
    %v2137 = vpack.c.b16 %v1817, %v1813
    %v2138 = vpack.c.b16 %v1818, %v1814
    %v2139 = vpack.c.b16 %v1819, %v1815
    %v2140 = vpack.c.b16 %v1824, %v1820
    %v2141 = vpack.c.b16 %v1825, %v1821
    %v2142 = vpack.c.b16 %v1826, %v1822
    %v2143 = vpack.c.b16 %v1827, %v1823
    %v2144 = vpack.c.b16 %v1832, %v1828
    %v2145 = vpack.c.b16 %v1833, %v1829
    %v2146 = vpack.c.b16 %v1834, %v1830
    %v2147 = vpack.c.b16 %v1835, %v1831
    %v2148 = vpack.c.b16 %v1840, %v1836
    %v2149 = vpack.c.b16 %v1841, %v1837
    %v2150 = vpack.c.b16 %v1842, %v1838
    %v2151 = vpack.c.b16 %v1843, %v1839
    %v2152 = vpack.c.b16 %v1848, %v1844
    %v2153 = vpack.c.b16 %v1849, %v1845
    %v2154 = vpack.c.b16 %v1850, %v1846
    %v2155 = vpack.c.b16 %v1851, %v1847
    %v2156 = vpack.c.b16 %v1856, %v1852
    %v2157 = vpack.c.b16 %v1857, %v1853
    %v2158 = vpack.c.b16 %v1858, %v1854
    %v2159 = vpack.c.b16 %v1859, %v1855
    %v2160 = vpack.c.b16 %v1864, %v1860
    %v2161 = vpack.c.b16 %v1865, %v1861
    %v2162 = vpack.c.b16 %v1866, %v1862
    %v2163 = vpack.c.b16 %v1867, %v1863
    %v2164 = vpack.c.b16 %v1872, %v1868
    %v2165 = vpack.c.b16 %v1873, %v1869
    %v2166 = vpack.c.b16 %v1874, %v1870
    %v2167 = vpack.c.b16 %v1875, %v1871
    %v2168 = vpack.c.b16 %v1880, %v1876
    %v2169 = vpack.c.b16 %v1881, %v1877
    %v2170 = vpack.c.b16 %v1882, %v1878
    %v2171 = vpack.c.b16 %v1883, %v1879
    %v2172 = vpack.c.b16 %v1888, %v1884
    %v2173 = vpack.c.b16 %v1889, %v1885
    %v2174 = vpack.c.b16 %v1890, %v1886
    %v2175 = vpack.c.b16 %v1891, %v1887
    %v2176 = vpack.c.b16 %v1896, %v1892
    %v2177 = vpack.c.b16 %v1897, %v1893
    %v2178 = vpack.c.b16 %v1898, %v1894
    %v2179 = vpack.c.b16 %v1899, %v1895
    %v2180 = vpack.c.b16 %v1904, %v1900
    %v2181 = vpack.c.b16 %v1905, %v1901
    %v2182 = vpack.c.b16 %v1906, %v1902
    %v2183 = vpack.c.b16 %v1907, %v1903
    %v2184 = vpack.c.b16 %v1912, %v1908
    %v2185 = vpack.c.b16 %v1913, %v1909
    %v2186 = vpack.c.b16 %v1914, %v1910
    %v2187 = vpack.c.b16 %v1915, %v1911
    %v2188 = vpack.c.b16 %v1920, %v1916
    %v2189 = vpack.c.b16 %v1921, %v1917
    %v2190 = vpack.c.b16 %v1922, %v1918
    %v2191 = vpack.c.b16 %v1923, %v1919
    %v2192 = vpack.c.b16 %v1928, %v1924
    %v2193 = vpack.c.b16 %v1929, %v1925
    %v2194 = vpack.c.b16 %v1930, %v1926
    %v2195 = vpack.c.b16 %v1931, %v1927
    %v2196 = vpack.c.b16 %v1936, %v1932
    %v2197 = vpack.c.b16 %v1937, %v1933
    %v2198 = vpack.c.b16 %v1938, %v1934
    %v2199 = vpack.c.b16 %v1939, %v1935
    %v2200 = vpack.c.b16 %v1944, %v1940
    %v2201 = vpack.c.b16 %v1945, %v1941
    %v2202 = vpack.c.b16 %v1946, %v1942
    %v2203 = vpack.c.b16 %v1947, %v1943
    %2460 = vmatprep.subr.bf16.mxu0 %v1949
    %2461 = vmatpush1.bf16.msra.mxu0 %v1948
    %2462 = vmatprep.subr.bf16.mxu0 %v1953
    %2463 = vmatpush1.bf16.msra.mxu0 %v1952
    %2464 = vmatprep.subr.bf16.mxu0 %v1957
    %2465 = vmatpush1.bf16.msra.mxu0 %v1956
    %2466 = vmatprep.subr.bf16.mxu0 %v1961
    %2467 = vmatpush1.bf16.msra.mxu0 %v1960
    %2468 = vmatprep.subr.bf16.mxu0 %v1965
    %2469 = vmatpush1.bf16.msra.mxu0 %v1964
    %2470 = vmatprep.subr.bf16.mxu0 %v1969
    %2471 = vmatpush1.bf16.msra.mxu0 %v1968
    %2472 = vmatprep.subr.bf16.mxu0 %v1973
    %2473 = vmatpush1.bf16.msra.mxu0 %v1972
    %2474 = vmatprep.subr.bf16.mxu0 %v1977
    %2475 = vmatpush1.bf16.msra.mxu0 %v1976
    %2476 = vmatprep.subr.bf16.mxu0 %v1981
    %2477 = vmatpush1.bf16.msra.mxu0 %v1980
    %2478 = vmatprep.subr.bf16.mxu0 %v1985
    %2479 = vmatpush1.bf16.msra.mxu0 %v1984
    %2480 = vmatprep.subr.bf16.mxu0 %v1989
    %2481 = vmatpush1.bf16.msra.mxu0 %v1988
    %2482 = vmatprep.subr.bf16.mxu0 %v1993
    %2483 = vmatpush1.bf16.msra.mxu0 %v1992
    %2484 = vmatprep.subr.bf16.mxu0 %v1997
    %2485 = vmatpush1.bf16.msra.mxu0 %v1996
    %2486 = vmatprep.subr.bf16.mxu0 %v2001
    %2487 = vmatpush1.bf16.msra.mxu0 %v2000
    %2488 = vmatprep.subr.bf16.mxu0 %v2005
    %2489 = vmatpush1.bf16.msra.mxu0 %v2004
    %2490 = vmatprep.subr.bf16.mxu0 %v2009
    %2491 = vmatpush1.bf16.msra.mxu0 %v2008
    %2492 = vmatprep.mubr.bf16.mxu0 %v917
    %2493 = vmatmul.mubr.bf16.gmra.mrb[0].mxu0 %v916
    %v2494 = vpop.f32.mrb[0].mxu0
    %v2495 = vadd.f32 0.0, %v2494
    %v2496 = vpop.f32.mrb[0].mxu0
    %v2497 = vadd.f32 0.0, %v2496
    %v2498 = vpop.f32.mrb[0].mxu0
    %v2499 = vpop.f32.mrb[0].mxu0
    %2500 = vdwg.mxu0
    %2501 = vmatprep.subr.bf16.mxu0 %v2013
    %2502 = vmatpush1.bf16.msra.mxu0 %v2012
    %2503 = vmatprep.subr.bf16.mxu0 %v2017
    %2504 = vmatpush1.bf16.msra.mxu0 %v2016
    %2505 = vmatprep.subr.bf16.mxu0 %v2021
    %2506 = vmatpush1.bf16.msra.mxu0 %v2020
    %2507 = vmatprep.subr.bf16.mxu0 %v2025
    %2508 = vmatpush1.bf16.msra.mxu0 %v2024
    %2509 = vmatprep.subr.bf16.mxu0 %v2029
    %2510 = vmatpush1.bf16.msra.mxu0 %v2028
    %2511 = vmatprep.subr.bf16.mxu0 %v2033
    %2512 = vmatpush1.bf16.msra.mxu0 %v2032
    %2513 = vmatprep.subr.bf16.mxu0 %v2037
    %2514 = vmatpush1.bf16.msra.mxu0 %v2036
    %2515 = vmatprep.subr.bf16.mxu0 %v2041
    %2516 = vmatpush1.bf16.msra.mxu0 %v2040
    %2517 = vmatprep.subr.bf16.mxu0 %v2045
    %2518 = vmatpush1.bf16.msra.mxu0 %v2044
    %2519 = vmatprep.subr.bf16.mxu0 %v2049
    %2520 = vmatpush1.bf16.msra.mxu0 %v2048
    %2521 = vmatprep.subr.bf16.mxu0 %v2053
    %2522 = vmatpush1.bf16.msra.mxu0 %v2052
    %2523 = vmatprep.subr.bf16.mxu0 %v2057
    %2524 = vmatpush1.bf16.msra.mxu0 %v2056
    %2525 = vmatprep.subr.bf16.mxu0 %v2061
    %2526 = vmatpush1.bf16.msra.mxu0 %v2060
    %2527 = vmatprep.subr.bf16.mxu0 %v2065
    %2528 = vmatpush1.bf16.msra.mxu0 %v2064
    %2529 = vmatprep.subr.bf16.mxu0 %v2069
    %2530 = vmatpush1.bf16.msra.mxu0 %v2068
    %2531 = vmatprep.subr.bf16.mxu0 %v2073
    %2532 = vmatpush1.bf16.msra.mxu0 %v2072
    %2533 = vmatprep.mubr.bf16.mxu0 %v919
    %2534 = vmatmul.mubr.bf16.gmra.mrb[0].mxu0 %v918
    %v2535 = vpop.f32.mrb[0].mxu0
    %v2536 = vadd.f32 %v2495, %v2535
    %v2537 = vpop.f32.mrb[0].mxu0
    %v2538 = vadd.f32 %v2497, %v2537
    %v2539 = vpop.f32.mrb[0].mxu0
    %v2540 = vpop.f32.mrb[0].mxu0
    %2541 = vdwg.mxu0
    %2542 = vmatprep.subr.bf16.mxu0 %v2077
    %2543 = vmatpush1.bf16.msra.mxu0 %v2076
    %2544 = vmatprep.subr.bf16.mxu0 %v2081
    %2545 = vmatpush1.bf16.msra.mxu0 %v2080
    %2546 = vmatprep.subr.bf16.mxu0 %v2085
    %2547 = vmatpush1.bf16.msra.mxu0 %v2084
    %2548 = vmatprep.subr.bf16.mxu0 %v2089
    %2549 = vmatpush1.bf16.msra.mxu0 %v2088
    %2550 = vmatprep.subr.bf16.mxu0 %v2093
    %2551 = vmatpush1.bf16.msra.mxu0 %v2092
    %2552 = vmatprep.subr.bf16.mxu0 %v2097
    %2553 = vmatpush1.bf16.msra.mxu0 %v2096
    %2554 = vmatprep.subr.bf16.mxu0 %v2101
    %2555 = vmatpush1.bf16.msra.mxu0 %v2100
    %2556 = vmatprep.subr.bf16.mxu0 %v2105
    %2557 = vmatpush1.bf16.msra.mxu0 %v2104
    %2558 = vmatprep.subr.bf16.mxu0 %v2109
    %2559 = vmatpush1.bf16.msra.mxu0 %v2108
    %2560 = vmatprep.subr.bf16.mxu0 %v2113
    %2561 = vmatpush1.bf16.msra.mxu0 %v2112
    %2562 = vmatprep.subr.bf16.mxu0 %v2117
    %2563 = vmatpush1.bf16.msra.mxu0 %v2116
    %2564 = vmatprep.subr.bf16.mxu0 %v2121
    %2565 = vmatpush1.bf16.msra.mxu0 %v2120
    %2566 = vmatprep.subr.bf16.mxu0 %v2125
    %2567 = vmatpush1.bf16.msra.mxu0 %v2124
    %2568 = vmatprep.subr.bf16.mxu0 %v2129
    %2569 = vmatpush1.bf16.msra.mxu0 %v2128
    %2570 = vmatprep.subr.bf16.mxu0 %v2133
    %2571 = vmatpush1.bf16.msra.mxu0 %v2132
    %2572 = vmatprep.subr.bf16.mxu0 %v2137
    %2573 = vmatpush1.bf16.msra.mxu0 %v2136
    %2574 = vmatprep.mubr.bf16.mxu0 %v921
    %2575 = vmatmul.mubr.bf16.gmra.mrb[0].mxu0 %v920
    %v2576 = vpop.f32.mrb[0].mxu0
    %v2577 = vadd.f32 %v2536, %v2576
    %v2578 = vpop.f32.mrb[0].mxu0
    %v2579 = vadd.f32 %v2538, %v2578
    %v2580 = vpop.f32.mrb[0].mxu0
    %v2581 = vpop.f32.mrb[0].mxu0
    %2582 = vdwg.mxu0
    %2583 = vmatprep.subr.bf16.mxu0 %v2141
    %2584 = vmatpush1.bf16.msra.mxu0 %v2140
    %2585 = vmatprep.subr.bf16.mxu0 %v2145
    %2586 = vmatpush1.bf16.msra.mxu0 %v2144
    %2587 = vmatprep.subr.bf16.mxu0 %v2149
    %2588 = vmatpush1.bf16.msra.mxu0 %v2148
    %2589 = vmatprep.subr.bf16.mxu0 %v2153
    %2590 = vmatpush1.bf16.msra.mxu0 %v2152
    %2591 = vmatprep.subr.bf16.mxu0 %v2157
    %2592 = vmatpush1.bf16.msra.mxu0 %v2156
    %2593 = vmatprep.subr.bf16.mxu0 %v2161
    %2594 = vmatpush1.bf16.msra.mxu0 %v2160
    %2595 = vmatprep.subr.bf16.mxu0 %v2165
    %2596 = vmatpush1.bf16.msra.mxu0 %v2164
    %2597 = vmatprep.subr.bf16.mxu0 %v2169
    %2598 = vmatpush1.bf16.msra.mxu0 %v2168
    %2599 = vmatprep.subr.bf16.mxu0 %v2173
    %2600 = vmatpush1.bf16.msra.mxu0 %v2172
    %2601 = vmatprep.subr.bf16.mxu0 %v2177
    %2602 = vmatpush1.bf16.msra.mxu0 %v2176
    %2603 = vmatprep.subr.bf16.mxu0 %v2181
    %2604 = vmatpush1.bf16.msra.mxu0 %v2180
    %2605 = vmatprep.subr.bf16.mxu0 %v2185
    %2606 = vmatpush1.bf16.msra.mxu0 %v2184
    %2607 = vmatprep.subr.bf16.mxu0 %v2189
    %2608 = vmatpush1.bf16.msra.mxu0 %v2188
    %2609 = vmatprep.subr.bf16.mxu0 %v2193
    %2610 = vmatpush1.bf16.msra.mxu0 %v2192
    %2611 = vmatprep.subr.bf16.mxu0 %v2197
    %2612 = vmatpush1.bf16.msra.mxu0 %v2196
    %2613 = vmatprep.subr.bf16.mxu0 %v2201
    %2614 = vmatpush1.bf16.msra.mxu0 %v2200
    %2615 = vmatprep.mubr.bf16.mxu0 %v923
    %2616 = vmatmul.mubr.bf16.gmra.mrb[0].mxu0 %v922
    %v2617 = vpop.f32.mrb[0].mxu0
    %v2618 = vadd.f32 %v2577, %v2617
    %v2619 = vpop.f32.mrb[0].mxu0
    %v2620 = vadd.f32 %v2579, %v2619
    %v2621 = vpop.f32.mrb[0].mxu0
    %v2622 = vpop.f32.mrb[0].mxu0
    %2623 = vdwg.mxu0
    %2624 = vmatprep.subr.bf16.mxu0 %v1951
    %2625 = vmatpush1.bf16.msra.mxu0 %v1950
    %2626 = vmatprep.subr.bf16.mxu0 %v1955
    %2627 = vmatpush1.bf16.msra.mxu0 %v1954
    %2628 = vmatprep.subr.bf16.mxu0 %v1959
    %2629 = vmatpush1.bf16.msra.mxu0 %v1958
    %2630 = vmatprep.subr.bf16.mxu0 %v1963
    %2631 = vmatpush1.bf16.msra.mxu0 %v1962
    %2632 = vmatprep.subr.bf16.mxu0 %v1967
    %2633 = vmatpush1.bf16.msra.mxu0 %v1966
    %2634 = vmatprep.subr.bf16.mxu0 %v1971
    %2635 = vmatpush1.bf16.msra.mxu0 %v1970
    %2636 = vmatprep.subr.bf16.mxu0 %v1975
    %2637 = vmatpush1.bf16.msra.mxu0 %v1974
    %2638 = vmatprep.subr.bf16.mxu0 %v1979
    %2639 = vmatpush1.bf16.msra.mxu0 %v1978
    %2640 = vmatprep.subr.bf16.mxu0 %v1983
    %2641 = vmatpush1.bf16.msra.mxu0 %v1982
    %2642 = vmatprep.subr.bf16.mxu0 %v1987
    %2643 = vmatpush1.bf16.msra.mxu0 %v1986
    %2644 = vmatprep.subr.bf16.mxu0 %v1991
    %2645 = vmatpush1.bf16.msra.mxu0 %v1990
    %2646 = vmatprep.subr.bf16.mxu0 %v1995
    %2647 = vmatpush1.bf16.msra.mxu0 %v1994
    %2648 = vmatprep.subr.bf16.mxu0 %v1999
    %2649 = vmatpush1.bf16.msra.mxu0 %v1998
    %2650 = vmatprep.subr.bf16.mxu0 %v2003
    %2651 = vmatpush1.bf16.msra.mxu0 %v2002
    %2652 = vmatprep.subr.bf16.mxu0 %v2007
    %2653 = vmatpush1.bf16.msra.mxu0 %v2006
    %2654 = vmatprep.subr.bf16.mxu0 %v2011
    %2655 = vmatpush1.bf16.msra.mxu0 %v2010
    %2656 = vmatprep.mubr.bf16.mxu0 %v917
    %2657 = vmatmul.mubr.bf16.gmra.mrb[0].mxu0 %v916
    %v2658 = vpop.f32.mrb[0].mxu0
    %v2659 = vadd.f32 0.0, %v2658
    %v2660 = vpop.f32.mrb[0].mxu0
    %v2661 = vadd.f32 0.0, %v2660
    %v2662 = vpop.f32.mrb[0].mxu0
    %v2663 = vpop.f32.mrb[0].mxu0
    %2664 = vdwg.mxu0
    %2665 = vmatprep.subr.bf16.mxu0 %v2015
    %2666 = vmatpush1.bf16.msra.mxu0 %v2014
    %2667 = vmatprep.subr.bf16.mxu0 %v2019
    %2668 = vmatpush1.bf16.msra.mxu0 %v2018
    %2669 = vmatprep.subr.bf16.mxu0 %v2023
    %2670 = vmatpush1.bf16.msra.mxu0 %v2022
    %2671 = vmatprep.subr.bf16.mxu0 %v2027
    %2672 = vmatpush1.bf16.msra.mxu0 %v2026
    %2673 = vmatprep.subr.bf16.mxu0 %v2031
    %2674 = vmatpush1.bf16.msra.mxu0 %v2030
    %2675 = vmatprep.subr.bf16.mxu0 %v2035
    %2676 = vmatpush1.bf16.msra.mxu0 %v2034
    %2677 = vmatprep.subr.bf16.mxu0 %v2039
    %2678 = vmatpush1.bf16.msra.mxu0 %v2038
    %2679 = vmatprep.subr.bf16.mxu0 %v2043
    %2680 = vmatpush1.bf16.msra.mxu0 %v2042
    %2681 = vmatprep.subr.bf16.mxu0 %v2047
    %2682 = vmatpush1.bf16.msra.mxu0 %v2046
    %2683 = vmatprep.subr.bf16.mxu0 %v2051
    %2684 = vmatpush1.bf16.msra.mxu0 %v2050
    %2685 = vmatprep.subr.bf16.mxu0 %v2055
    %2686 = vmatpush1.bf16.msra.mxu0 %v2054
    %2687 = vmatprep.subr.bf16.mxu0 %v2059
    %2688 = vmatpush1.bf16.msra.mxu0 %v2058
    %2689 = vmatprep.subr.bf16.mxu0 %v2063
    %2690 = vmatpush1.bf16.msra.mxu0 %v2062
    %2691 = vmatprep.subr.bf16.mxu0 %v2067
    %2692 = vmatpush1.bf16.msra.mxu0 %v2066
    %2693 = vmatprep.subr.bf16.mxu0 %v2071
    %2694 = vmatpush1.bf16.msra.mxu0 %v2070
    %2695 = vmatprep.subr.bf16.mxu0 %v2075
    %2696 = vmatpush1.bf16.msra.mxu0 %v2074
    %2697 = vmatprep.mubr.bf16.mxu0 %v919
    %2698 = vmatmul.mubr.bf16.gmra.mrb[0].mxu0 %v918
    %v2699 = vpop.f32.mrb[0].mxu0
    %v2700 = vadd.f32 %v2659, %v2699
    %v2701 = vpop.f32.mrb[0].mxu0
    %v2702 = vadd.f32 %v2661, %v2701
    %v2703 = vpop.f32.mrb[0].mxu0
    %v2704 = vpop.f32.mrb[0].mxu0
    %2705 = vdwg.mxu0
    %2706 = vmatprep.subr.bf16.mxu0 %v2079
    %2707 = vmatpush1.bf16.msra.mxu0 %v2078
    %2708 = vmatprep.subr.bf16.mxu0 %v2083
    %2709 = vmatpush1.bf16.msra.mxu0 %v2082
    %2710 = vmatprep.subr.bf16.mxu0 %v2087
    %2711 = vmatpush1.bf16.msra.mxu0 %v2086
    %2712 = vmatprep.subr.bf16.mxu0 %v2091
    %2713 = vmatpush1.bf16.msra.mxu0 %v2090
    %2714 = vmatprep.subr.bf16.mxu0 %v2095
    %2715 = vmatpush1.bf16.msra.mxu0 %v2094
    %2716 = vmatprep.subr.bf16.mxu0 %v2099
    %2717 = vmatpush1.bf16.msra.mxu0 %v2098
    %2718 = vmatprep.subr.bf16.mxu0 %v2103
    %2719 = vmatpush1.bf16.msra.mxu0 %v2102
    %2720 = vmatprep.subr.bf16.mxu0 %v2107
    %2721 = vmatpush1.bf16.msra.mxu0 %v2106
    %2722 = vmatprep.subr.bf16.mxu0 %v2111
    %2723 = vmatpush1.bf16.msra.mxu0 %v2110
    %2724 = vmatprep.subr.bf16.mxu0 %v2115
    %2725 = vmatpush1.bf16.msra.mxu0 %v2114
    %2726 = vmatprep.subr.bf16.mxu0 %v2119
    %2727 = vmatpush1.bf16.msra.mxu0 %v2118
    %2728 = vmatprep.subr.bf16.mxu0 %v2123
    %2729 = vmatpush1.bf16.msra.mxu0 %v2122
    %2730 = vmatprep.subr.bf16.mxu0 %v2127
    %2731 = vmatpush1.bf16.msra.mxu0 %v2126
    %2732 = vmatprep.subr.bf16.mxu0 %v2131
    %2733 = vmatpush1.bf16.msra.mxu0 %v2130
    %2734 = vmatprep.subr.bf16.mxu0 %v2135
    %2735 = vmatpush1.bf16.msra.mxu0 %v2134
    %2736 = vmatprep.subr.bf16.mxu0 %v2139
    %2737 = vmatpush1.bf16.msra.mxu0 %v2138
    %2738 = vmatprep.mubr.bf16.mxu0 %v921
    %2739 = vmatmul.mubr.bf16.gmra.mrb[0].mxu0 %v920
    %v2740 = vpop.f32.mrb[0].mxu0
    %v2741 = vadd.f32 %v2700, %v2740
    %v2742 = vpop.f32.mrb[0].mxu0
    %v2743 = vadd.f32 %v2702, %v2742
    %v2744 = vpop.f32.mrb[0].mxu0
    %v2745 = vpop.f32.mrb[0].mxu0
    %2746 = vdwg.mxu0
    %2747 = vmatprep.subr.bf16.mxu0 %v2143
    %2748 = vmatpush1.bf16.msra.mxu0 %v2142
    %2749 = vmatprep.subr.bf16.mxu0 %v2147
    %2750 = vmatpush1.bf16.msra.mxu0 %v2146
    %2751 = vmatprep.subr.bf16.mxu0 %v2151
    %2752 = vmatpush1.bf16.msra.mxu0 %v2150
    %2753 = vmatprep.subr.bf16.mxu0 %v2155
    %2754 = vmatpush1.bf16.msra.mxu0 %v2154
    %2755 = vmatprep.subr.bf16.mxu0 %v2159
    %2756 = vmatpush1.bf16.msra.mxu0 %v2158
    %2757 = vmatprep.subr.bf16.mxu0 %v2163
    %2758 = vmatpush1.bf16.msra.mxu0 %v2162
    %2759 = vmatprep.subr.bf16.mxu0 %v2167
    %2760 = vmatpush1.bf16.msra.mxu0 %v2166
    %2761 = vmatprep.subr.bf16.mxu0 %v2171
    %2762 = vmatpush1.bf16.msra.mxu0 %v2170
    %2763 = vmatprep.subr.bf16.mxu0 %v2175
    %2764 = vmatpush1.bf16.msra.mxu0 %v2174
    %2765 = vmatprep.subr.bf16.mxu0 %v2179
    %2766 = vmatpush1.bf16.msra.mxu0 %v2178
    %2767 = vmatprep.subr.bf16.mxu0 %v2183
    %2768 = vmatpush1.bf16.msra.mxu0 %v2182
    %2769 = vmatprep.subr.bf16.mxu0 %v2187
    %2770 = vmatpush1.bf16.msra.mxu0 %v2186
    %2771 = vmatprep.subr.bf16.mxu0 %v2191
    %2772 = vmatpush1.bf16.msra.mxu0 %v2190
    %2773 = vmatprep.subr.bf16.mxu0 %v2195
    %2774 = vmatpush1.bf16.msra.mxu0 %v2194
    %2775 = vmatprep.subr.bf16.mxu0 %v2199
    %2776 = vmatpush1.bf16.msra.mxu0 %v2198
    %2777 = vmatprep.subr.bf16.mxu0 %v2203
    %2778 = vmatpush1.bf16.msra.mxu0 %v2202
    %2779 = vmatprep.mubr.bf16.mxu0 %v923
    %2780 = vmatmul.mubr.bf16.gmra.mrb[0].mxu0 %v922
    %v2781 = vpop.f32.mrb[0].mxu0
    %v2782 = vadd.f32 %v2741, %v2781
    %v2783 = vpop.f32.mrb[0].mxu0
    %v2784 = vadd.f32 %v2743, %v2783
    %v2785 = vpop.f32.mrb[0].mxu0
    %v2786 = vpop.f32.mrb[0].mxu0
    %2787 = vdwg.mxu0
    %v2788 = vld [vmem:[#allocation12 + $0x10] sm:$0xf]
    %v2789 = vld [vmem:[#allocation12 + $0x14] sm:$0xf]
    %v2790 = vrot.slane %v2618, 4
    %v2791 = vadd.f32 %v2618, %v2790
    %v2792 = vrot.slane %v2791, 2
    %v2793 = vadd.f32 %v2791, %v2792
    %v2794 = vrot.slane %v2793, 1
    %v2795 = vadd.f32 %v2793, %v2794
    %v2796 = vrot.slane %v2620, 4
    %v2797 = vadd.f32 %v2620, %v2796
    %v2798 = vrot.slane %v2797, 2
    %v2799 = vadd.f32 %v2797, %v2798
    %v2800 = vrot.slane %v2799, 1
    %v2801 = vadd.f32 %v2799, %v2800
    %v2802 = vrot.slane %v2782, 4
    %v2803 = vadd.f32 %v2782, %v2802
    %v2804 = vrot.slane %v2803, 2
    %v2805 = vadd.f32 %v2803, %v2804
    %v2806 = vrot.slane %v2805, 1
    %v2807 = vadd.f32 %v2805, %v2806
    %v2808 = vrot.slane %v2784, 4
    %v2809 = vadd.f32 %v2784, %v2808
    %v2810 = vrot.slane %v2809, 2
    %v2811 = vadd.f32 %v2809, %v2810
    %v2812 = vrot.slane %v2811, 1
    %v2813 = vadd.f32 %v2811, %v2812
    %v2814 = vmul.f32 %v2795, %v705
    %v2815 = vmul.f32 %v2801, %v705
    %v2816 = vmul.f32 %v2807, %v705
    %v2817 = vmul.f32 %v2813, %v705
    %v2818 = vsub.f32 %v2618, %v2814
    %v2819 = vsub.f32 %v2620, %v2815
    %v2820 = vsub.f32 %v2782, %v2816
    %v2821 = vsub.f32 %v2784, %v2817
    %v2822 = vmul.f32 %v2818, %v2818
    %v2823 = vmul.f32 %v2819, %v2819
    %v2824 = vmul.f32 %v2820, %v2820
    %v2825 = vmul.f32 %v2821, %v2821
    %v2826 = vrot.slane %v2822, 4
    %v2827 = vadd.f32 %v2822, %v2826
    %v2828 = vrot.slane %v2827, 2
    %v2829 = vadd.f32 %v2827, %v2828
    %v2830 = vrot.slane %v2829, 1
    %v2831 = vadd.f32 %v2829, %v2830
    %v2832 = vrot.slane %v2823, 4
    %v2833 = vadd.f32 %v2823, %v2832
    %v2834 = vrot.slane %v2833, 2
    %v2835 = vadd.f32 %v2833, %v2834
    %v2836 = vrot.slane %v2835, 1
    %v2837 = vadd.f32 %v2835, %v2836
    %v2838 = vrot.slane %v2824, 4
    %v2839 = vadd.f32 %v2824, %v2838
    %v2840 = vrot.slane %v2839, 2
    %v2841 = vadd.f32 %v2839, %v2840
    %v2842 = vrot.slane %v2841, 1
    %v2843 = vadd.f32 %v2841, %v2842
    %v2844 = vrot.slane %v2825, 4
    %v2845 = vadd.f32 %v2825, %v2844
    %v2846 = vrot.slane %v2845, 2
    %v2847 = vadd.f32 %v2845, %v2846
    %v2848 = vrot.slane %v2847, 1
    %v2849 = vadd.f32 %v2847, %v2848
    %v2850 = vmul.f32 %v2831, %v705
    %v2851 = vmul.f32 %v2837, %v705
    %v2852 = vmul.f32 %v2843, %v705
    %v2853 = vmul.f32 %v2849, %v705
    %v2854 = vadd.f32 %v2850, 1e-05
    %v2855 = vadd.f32 %v2851, 1e-05
    %v2856 = vadd.f32 %v2852, 1e-05
    %v2857 = vadd.f32 %v2853, 1e-05
    %v2858 = vrsqrt.pop %v2854
    %v2859 = vrsqrt.pop %v2855
    %v2860 = vrsqrt.pop %v2856
    %v2861 = vrsqrt.pop %v2857
    %v2862 = vmul.f32 %v2818, %v2858
    %v2863 = vmul.f32 %v2819, %v2859
    %v2864 = vmul.f32 %v2820, %v2860
    %v2865 = vmul.f32 %v2821, %v2861
    %v2867 = vlaneseq
    %v2868 = vshrl.u32 %v2867, 7
    %v2869 = vsub.s32 0, %v2868
    %v2870 = vrot.slane %v2788, %v2869
    %v2871 = vlaneseq
    %v2872 = vshrl.u32 %v2871, 7
    %v2873 = vsub.s32 1, %v2872
    %v2874 = vrot.slane %v2788, %v2873
    %v2875 = vlaneseq
    %v2876 = vshrl.u32 %v2875, 7
    %v2877 = vsub.s32 2, %v2876
    %v2878 = vrot.slane %v2788, %v2877
    %v2879 = vlaneseq
    %v2880 = vshrl.u32 %v2879, 7
    %v2881 = vsub.s32 3, %v2880
    %v2882 = vrot.slane %v2788, %v2881
    %v2887 = vmul.f32 %v2862, %v2870
    %v2888 = vmul.f32 %v2863, %v2874
    %v2889 = vmul.f32 %v2864, %v2878
    %v2890 = vmul.f32 %v2865, %v2882
    %v2892 = vlaneseq
    %v2893 = vshrl.u32 %v2892, 7
    %v2894 = vsub.s32 0, %v2893
    %v2895 = vrot.slane %v2789, %v2894
    %v2896 = vlaneseq
    %v2897 = vshrl.u32 %v2896, 7
    %v2898 = vsub.s32 1, %v2897
    %v2899 = vrot.slane %v2789, %v2898
    %v2900 = vlaneseq
    %v2901 = vshrl.u32 %v2900, 7
    %v2902 = vsub.s32 2, %v2901
    %v2903 = vrot.slane %v2789, %v2902
    %v2904 = vlaneseq
    %v2905 = vshrl.u32 %v2904, 7
    %v2906 = vsub.s32 3, %v2905
    %v2907 = vrot.slane %v2789, %v2906
    %v2912 = vadd.f32 %v2887, %v2895
    %v2913 = vadd.f32 %v2888, %v2899
    %v2914 = vadd.f32 %v2889, %v2903
    %v2915 = vadd.f32 %v2890, %v2907
    %v2916 = vmax.f32 %v2912, 0.0
    %v2917 = vmax.f32 %v2913, 0.0
    %v2918 = vmax.f32 %v2914, 0.0
    %v2919 = vmax.f32 %v2915, 0.0
    %v2920 = vpack.c.bf16 %v2916, %v2916
    %v2921 = vpack.c.bf16 %v2917, %v2917
    %v2922 = vpack.c.bf16 %v2918, %v2918
    %v2923 = vpack.c.bf16 %v2919, %v2919
    %v2924 = vld [vmem:[#allocation11] sm:$0xf]
    %v2925 = vld [vmem:[#allocation11 + $0x4] sm:$0xf]
    %v2926 = vld [vmem:[#allocation11 + $0x8] sm:$0xf]
    %v2927 = vld [vmem:[#allocation11 + $0xc] sm:$0xf]
    %v2928 = vld [vmem:[#allocation11 + $0x10] sm:$0xf]
    %v2929 = vld [vmem:[#allocation11 + $0x14] sm:$0xf]
    %v2930 = vld [vmem:[#allocation11 + $0x18] sm:$0xf]
    %v2931 = vld [vmem:[#allocation11 + $0x1c] sm:$0xf]
    %v2932 = vld [vmem:[#allocation11 + $0x20] sm:$0xf]
    %v2933 = vld [vmem:[#allocation11 + $0x24] sm:$0xf]
    %v2934 = vld [vmem:[#allocation11 + $0x28] sm:$0xf]
    %v2935 = vld [vmem:[#allocation11 + $0x2c] sm:$0xf]
    %v2936 = vld [vmem:[#allocation11 + $0x30] sm:$0xf]
    %v2937 = vld [vmem:[#allocation11 + $0x34] sm:$0xf]
    %v2938 = vld [vmem:[#allocation11 + $0x38] sm:$0xf]
    %v2939 = vld [vmem:[#allocation11 + $0x3c] sm:$0xf]
    %v2940 = vld [vmem:[#allocation11 + $0x40] sm:$0xf]
    %v2941 = vld [vmem:[#allocation11 + $0x44] sm:$0xf]
    %v2942 = vld [vmem:[#allocation11 + $0x48] sm:$0xf]
    %v2943 = vld [vmem:[#allocation11 + $0x4c] sm:$0xf]
    %v2944 = vld [vmem:[#allocation11 + $0x50] sm:$0xf]
    %v2945 = vld [vmem:[#allocation11 + $0x54] sm:$0xf]
    %v2946 = vld [vmem:[#allocation11 + $0x58] sm:$0xf]
    %v2947 = vld [vmem:[#allocation11 + $0x5c] sm:$0xf]
    %v2948 = vld [vmem:[#allocation11 + $0x60] sm:$0xf]
    %v2949 = vld [vmem:[#allocation11 + $0x64] sm:$0xf]
    %v2950 = vld [vmem:[#allocation11 + $0x68] sm:$0xf]
    %v2951 = vld [vmem:[#allocation11 + $0x6c] sm:$0xf]
    %v2952 = vld [vmem:[#allocation11 + $0x70] sm:$0xf]
    %v2953 = vld [vmem:[#allocation11 + $0x74] sm:$0xf]
    %v2954 = vld [vmem:[#allocation11 + $0x78] sm:$0xf]
    %v2955 = vld [vmem:[#allocation11 + $0x7c] sm:$0xf]
    %v2956 = vld [vmem:[#allocation11 + $0x80] sm:$0xf]
    %v2957 = vld [vmem:[#allocation11 + $0x84] sm:$0xf]
    %v2958 = vld [vmem:[#allocation11 + $0x88] sm:$0xf]
    %v2959 = vld [vmem:[#allocation11 + $0x8c] sm:$0xf]
    %v2960 = vld [vmem:[#allocation11 + $0x90] sm:$0xf]
    %v2961 = vld [vmem:[#allocation11 + $0x94] sm:$0xf]
    %v2962 = vld [vmem:[#allocation11 + $0x98] sm:$0xf]
    %v2963 = vld [vmem:[#allocation11 + $0x9c] sm:$0xf]
    %v2964 = vld [vmem:[#allocation11 + $0xa0] sm:$0xf]
    %v2965 = vld [vmem:[#allocation11 + $0xa4] sm:$0xf]
    %v2966 = vld [vmem:[#allocation11 + $0xa8] sm:$0xf]
    %v2967 = vld [vmem:[#allocation11 + $0xac] sm:$0xf]
    %v2968 = vld [vmem:[#allocation11 + $0xb0] sm:$0xf]
    %v2969 = vld [vmem:[#allocation11 + $0xb4] sm:$0xf]
    %v2970 = vld [vmem:[#allocation11 + $0xb8] sm:$0xf]
    %v2971 = vld [vmem:[#allocation11 + $0xbc] sm:$0xf]
    %v2972 = vld [vmem:[#allocation11 + $0xc0] sm:$0xf]
    %v2973 = vld [vmem:[#allocation11 + $0xc4] sm:$0xf]
    %v2974 = vld [vmem:[#allocation11 + $0xc8] sm:$0xf]
    %v2975 = vld [vmem:[#allocation11 + $0xcc] sm:$0xf]
    %v2976 = vld [vmem:[#allocation11 + $0xd0] sm:$0xf]
    %v2977 = vld [vmem:[#allocation11 + $0xd4] sm:$0xf]
    %v2978 = vld [vmem:[#allocation11 + $0xd8] sm:$0xf]
    %v2979 = vld [vmem:[#allocation11 + $0xdc] sm:$0xf]
    %v2980 = vld [vmem:[#allocation11 + $0xe0] sm:$0xf]
    %v2981 = vld [vmem:[#allocation11 + $0xe4] sm:$0xf]
    %v2982 = vld [vmem:[#allocation11 + $0xe8] sm:$0xf]
    %v2983 = vld [vmem:[#allocation11 + $0xec] sm:$0xf]
    %v2984 = vld [vmem:[#allocation11 + $0xf0] sm:$0xf]
    %v2985 = vld [vmem:[#allocation11 + $0xf4] sm:$0xf]
    %v2986 = vld [vmem:[#allocation11 + $0xf8] sm:$0xf]
    %v2987 = vld [vmem:[#allocation11 + $0xfc] sm:$0xf]
    %v2988 = vld [vmem:[#allocation12 + $0x18] sm:$0x1]
    %v2990 = vlaneseq
    %v2991 = vshrl.u32 %v2990, 7
    %v2992 = vsub.s32 0, %v2991
    %v2993 = vrot.slane %v2988, %v2992
    %v3059 = vunpack.c.l.b16 %v2924
    %v3060 = vunpack.c.l.b16 %v2925
    %v3061 = vunpack.c.l.b16 %v2926
    %v3062 = vunpack.c.l.b16 %v2927
    %v3063 = vunpack.c.l.b16 %v2928
    %v3064 = vunpack.c.l.b16 %v2929
    %v3065 = vunpack.c.l.b16 %v2930
    %v3066 = vunpack.c.l.b16 %v2931
    %v3067 = vunpack.c.l.b16 %v2932
    %v3068 = vunpack.c.l.b16 %v2933
    %v3069 = vunpack.c.l.b16 %v2934
    %v3070 = vunpack.c.l.b16 %v2935
    %v3071 = vunpack.c.l.b16 %v2936
    %v3072 = vunpack.c.l.b16 %v2937
    %v3073 = vunpack.c.l.b16 %v2938
    %v3074 = vunpack.c.l.b16 %v2939
    %v3075 = vunpack.c.l.b16 %v2940
    %v3076 = vunpack.c.l.b16 %v2941
    %v3077 = vunpack.c.l.b16 %v2942
    %v3078 = vunpack.c.l.b16 %v2943
    %v3079 = vunpack.c.l.b16 %v2944
    %v3080 = vunpack.c.l.b16 %v2945
    %v3081 = vunpack.c.l.b16 %v2946
    %v3082 = vunpack.c.l.b16 %v2947
    %v3083 = vunpack.c.l.b16 %v2948
    %v3084 = vunpack.c.l.b16 %v2949
    %v3085 = vunpack.c.l.b16 %v2950
    %v3086 = vunpack.c.l.b16 %v2951
    %v3087 = vunpack.c.l.b16 %v2952
    %v3088 = vunpack.c.l.b16 %v2953
    %v3089 = vunpack.c.l.b16 %v2954
    %v3090 = vunpack.c.l.b16 %v2955
    %v3091 = vunpack.c.l.b16 %v2956
    %v3092 = vunpack.c.l.b16 %v2957
    %v3093 = vunpack.c.l.b16 %v2958
    %v3094 = vunpack.c.l.b16 %v2959
    %v3095 = vunpack.c.l.b16 %v2960
    %v3096 = vunpack.c.l.b16 %v2961
    %v3097 = vunpack.c.l.b16 %v2962
    %v3098 = vunpack.c.l.b16 %v2963
    %v3099 = vunpack.c.l.b16 %v2964
    %v3100 = vunpack.c.l.b16 %v2965
    %v3101 = vunpack.c.l.b16 %v2966
    %v3102 = vunpack.c.l.b16 %v2967
    %v3103 = vunpack.c.l.b16 %v2968
    %v3104 = vunpack.c.l.b16 %v2969
    %v3105 = vunpack.c.l.b16 %v2970
    %v3106 = vunpack.c.l.b16 %v2971
    %v3107 = vunpack.c.l.b16 %v2972
    %v3108 = vunpack.c.l.b16 %v2973
    %v3109 = vunpack.c.l.b16 %v2974
    %v3110 = vunpack.c.l.b16 %v2975
    %v3111 = vunpack.c.l.b16 %v2976
    %v3112 = vunpack.c.l.b16 %v2977
    %v3113 = vunpack.c.l.b16 %v2978
    %v3114 = vunpack.c.l.b16 %v2979
    %v3115 = vunpack.c.l.b16 %v2980
    %v3116 = vunpack.c.l.b16 %v2981
    %v3117 = vunpack.c.l.b16 %v2982
    %v3118 = vunpack.c.l.b16 %v2983
    %v3119 = vunpack.c.l.b16 %v2984
    %v3120 = vunpack.c.l.b16 %v2985
    %v3121 = vunpack.c.l.b16 %v2986
    %v3122 = vunpack.c.l.b16 %v2987
    %v3123 = vpack.c.b16 %v3060, %v3059
    %v3124 = vpack.c.b16 %v3062, %v3061
    %v3125 = vpack.c.b16 %v3064, %v3063
    %v3126 = vpack.c.b16 %v3066, %v3065
    %v3127 = vpack.c.b16 %v3068, %v3067
    %v3128 = vpack.c.b16 %v3070, %v3069
    %v3129 = vpack.c.b16 %v3072, %v3071
    %v3130 = vpack.c.b16 %v3074, %v3073
    %v3131 = vpack.c.b16 %v3076, %v3075
    %v3132 = vpack.c.b16 %v3078, %v3077
    %v3133 = vpack.c.b16 %v3080, %v3079
    %v3134 = vpack.c.b16 %v3082, %v3081
    %v3135 = vpack.c.b16 %v3084, %v3083
    %v3136 = vpack.c.b16 %v3086, %v3085
    %v3137 = vpack.c.b16 %v3088, %v3087
    %v3138 = vpack.c.b16 %v3090, %v3089
    %v3139 = vpack.c.b16 %v3092, %v3091
    %v3140 = vpack.c.b16 %v3094, %v3093
    %v3141 = vpack.c.b16 %v3096, %v3095
    %v3142 = vpack.c.b16 %v3098, %v3097
    %v3143 = vpack.c.b16 %v3100, %v3099
    %v3144 = vpack.c.b16 %v3102, %v3101
    %v3145 = vpack.c.b16 %v3104, %v3103
    %v3146 = vpack.c.b16 %v3106, %v3105
    %v3147 = vpack.c.b16 %v3108, %v3107
    %v3148 = vpack.c.b16 %v3110, %v3109
    %v3149 = vpack.c.b16 %v3112, %v3111
    %v3150 = vpack.c.b16 %v3114, %v3113
    %v3151 = vpack.c.b16 %v3116, %v3115
    %v3152 = vpack.c.b16 %v3118, %v3117
    %v3153 = vpack.c.b16 %v3120, %v3119
    %v3154 = vpack.c.b16 %v3122, %v3121
    %3187 = vmatprep.subr.bf16.mxu0 0
    %3188 = vmatpush1.bf16.msra.mxu0 %v3123
    %3189 = vmatprep.subr.bf16.mxu0 0
    %3190 = vmatpush1.bf16.msra.mxu0 %v3124
    %3191 = vmatprep.subr.bf16.mxu0 0
    %3192 = vmatpush1.bf16.msra.mxu0 %v3125
    %3193 = vmatprep.subr.bf16.mxu0 0
    %3194 = vmatpush1.bf16.msra.mxu0 %v3126
    %3195 = vmatprep.subr.bf16.mxu0 0
    %3196 = vmatpush1.bf16.msra.mxu0 %v3127
    %3197 = vmatprep.subr.bf16.mxu0 0
    %3198 = vmatpush1.bf16.msra.mxu0 %v3128
    %3199 = vmatprep.subr.bf16.mxu0 0
    %3200 = vmatpush1.bf16.msra.mxu0 %v3129
    %3201 = vmatprep.subr.bf16.mxu0 0
    %3202 = vmatpush1.bf16.msra.mxu0 %v3130
    %3203 = vmatprep.subr.bf16.mxu0 0
    %3204 = vmatpush1.bf16.msra.mxu0 %v3131
    %3205 = vmatprep.subr.bf16.mxu0 0
    %3206 = vmatpush1.bf16.msra.mxu0 %v3132
    %3207 = vmatprep.subr.bf16.mxu0 0
    %3208 = vmatpush1.bf16.msra.mxu0 %v3133
    %3209 = vmatprep.subr.bf16.mxu0 0
    %3210 = vmatpush1.bf16.msra.mxu0 %v3134
    %3211 = vmatprep.subr.bf16.mxu0 0
    %3212 = vmatpush1.bf16.msra.mxu0 %v3135
    %3213 = vmatprep.subr.bf16.mxu0 0
    %3214 = vmatpush1.bf16.msra.mxu0 %v3136
    %3215 = vmatprep.subr.bf16.mxu0 0
    %3216 = vmatpush1.bf16.msra.mxu0 %v3137
    %3217 = vmatprep.subr.bf16.mxu0 0
    %3218 = vmatpush1.bf16.msra.mxu0 %v3138
    %3219 = vmatprep.mubr.bf16.mxu0 %v2921
    %3220 = vmatmul.mubr.bf16.gmra.mrb[0].mxu0 %v2920
    %v3221 = vpop.f32.mrb[0].mxu0
    %v3222 = vadd.f32 %v2993, %v3221
    %v3223 = vpop.f32.mrb[0].mxu0
    %v3224 = vpop.f32.mrb[0].mxu0
    %v3225 = vpop.f32.mrb[0].mxu0
    %3226 = vdwg.mxu0
    %3227 = vmatprep.subr.bf16.mxu0 0
    %3228 = vmatpush1.bf16.msra.mxu0 %v3139
    %3229 = vmatprep.subr.bf16.mxu0 0
    %3230 = vmatpush1.bf16.msra.mxu0 %v3140
    %3231 = vmatprep.subr.bf16.mxu0 0
    %3232 = vmatpush1.bf16.msra.mxu0 %v3141
    %3233 = vmatprep.subr.bf16.mxu0 0
    %3234 = vmatpush1.bf16.msra.mxu0 %v3142
    %3235 = vmatprep.subr.bf16.mxu0 0
    %3236 = vmatpush1.bf16.msra.mxu0 %v3143
    %3237 = vmatprep.subr.bf16.mxu0 0
    %3238 = vmatpush1.bf16.msra.mxu0 %v3144
    %3239 = vmatprep.subr.bf16.mxu0 0
    %3240 = vmatpush1.bf16.msra.mxu0 %v3145
    %3241 = vmatprep.subr.bf16.mxu0 0
    %3242 = vmatpush1.bf16.msra.mxu0 %v3146
    %3243 = vmatprep.subr.bf16.mxu0 0
    %3244 = vmatpush1.bf16.msra.mxu0 %v3147
    %3245 = vmatprep.subr.bf16.mxu0 0
    %3246 = vmatpush1.bf16.msra.mxu0 %v3148
    %3247 = vmatprep.subr.bf16.mxu0 0
    %3248 = vmatpush1.bf16.msra.mxu0 %v3149
    %3249 = vmatprep.subr.bf16.mxu0 0
    %3250 = vmatpush1.bf16.msra.mxu0 %v3150
    %3251 = vmatprep.subr.bf16.mxu0 0
    %3252 = vmatpush1.bf16.msra.mxu0 %v3151
    %3253 = vmatprep.subr.bf16.mxu0 0
    %3254 = vmatpush1.bf16.msra.mxu0 %v3152
    %3255 = vmatprep.subr.bf16.mxu0 0
    %3256 = vmatpush1.bf16.msra.mxu0 %v3153
    %3257 = vmatprep.subr.bf16.mxu0 0
    %3258 = vmatpush1.bf16.msra.mxu0 %v3154
    %3259 = vmatprep.mubr.bf16.mxu0 %v2923
    %3260 = vmatmul.mubr.bf16.gmra.mrb[0].mxu0 %v2922
    %v3261 = vpop.f32.mrb[0].mxu0
    %v3262 = vadd.f32 %v3222, %v3261
    %v3263 = vpop.f32.mrb[0].mxu0
    %v3264 = vpop.f32.mrb[0].mxu0
    %v3265 = vpop.f32.mrb[0].mxu0
    %3266 = vdwg.mxu0
    %s3267 = sld [smem:[#allocation2]]
    %v3268 = vstv %s3267
    %v3269 = vrcp.pop %v3268
    %s3270 = vtos %v3269
    %v3271 = vld [vmem:[#allocation6] sm:$0xff]
    %v3272 = vadd.f32 %v3262, %v3271
    %v3273 = vstv %s3270
    %v3274 = vmul.f32 %v3272, %v3273
    %v3275 = vand.u32 2147483647, %v3274
    %v3276 = vsub.f32 0.0, %v3275
    %v3277 = vmul.f32 %v3276, 1.442695
    %v3278 = vpow.pop %v3277
    %v3279 = vadd.f32 %v3278, 1.0
    %v3280 = vrcp.pop %v3279
    %v3281 = vmul.f32 1.0, %v3280
    %v3282 = vlaneseq
    %v3283 = vand.u32 %v3282, 127
    %vm3284 = vcmp.eq.s32.totalorder %v3283, 0
    %vm3285 = vcmp.eq.s32.totalorder %v3283, 1
    %v3286 = vsel %vm3285, %v3281, 0.0
    %v3287 = vsel %vm3284, %v3262, %v3286
    %3288 = vst [vmem:[#allocation14] sm:$0xff] %v3287
    // Predicated region
    $region54: #{tpu_custom_call.1} parent=1 // pred_check
      _
    $region55: #{tpu_custom_call.1} parent=1 // pred_check_branch
      %3290 = sbr.rel (0) target = $region57
    $region56: #{tpu_custom_call.1} parent=1 // pred_region
      %s3292 = ssub.s32 128, 128
      %3293 = vsyncadd [#allocation5], %s3292
      %s3295 = sshll.u32 [#allocation14], 4
      %s3296 = int_to_ptr.vmem [resolvable:$true] %s3295
      %3298 = dma.vmem_to_hbm [thread:$0]  %s3296, 128, %s7, [#allocation5]
    $region57: #{tpu_custom_call.1} parent=1 // pred_fallthru
      _
    // Predicated region
    $region58: #{tpu_custom_call.1} parent=1 // pred_check
      _
    $region59: #{tpu_custom_call.1} parent=1 // pred_check_branch
      %3300 = sbr.rel (0) target = $region61
    $region60: #{tpu_custom_call.1} parent=1 // pred_region
      %3301 = dma.done [#allocation5], 128
    $region61: #{tpu_custom_call.1} parent=1 // pred_fallthru
      _
    %3302 = vsyncpa [#allocation4], 1
    %3303 = vsyncpa [#allocation7], 1
    %3304 = vsyncpa [#allocation10], 1
    %3305 = vsyncpa [#allocation13], 1
    %3306 = vsyncpa [#allocation5], 1

</llo_original>
